<compile_context>
chip_gen: v7x
topology: tpu7x:2x2x1
jax: 0.10.0
libtpu: 0.0.40
codegen_flags: <defaults>
</compile_context>

<pallas_src>
import functools

import jax
import jax.numpy as jnp
from jax.experimental import pallas as pl
from jax.experimental.pallas import tpu as pltpu

PACK = 8  # rows packed end-to-end onto the 128-lane axis


def _mlp_fused_kernel(*refs, n_layers: int):
    # refs = (x_ref, w1_ref, b1_ref, ..., wN_ref, bN_ref, out_ref)
    x_ref = refs[0]
    out_ref = refs[-1]
    h = x_ref[...].astype(jnp.float32)
    for i in range(n_layers):
        w_ref = refs[1 + 2 * i]   # block-diagonal bf16 (PACK*in, PACK*out)
        b_ref = refs[2 + 2 * i]   # tiled f32 (1, PACK*out)
        # bf16 MXU matmul, f32 accumulate; bias add / ReLU stay f32.
        acc = jnp.dot(h.astype(jnp.bfloat16), w_ref[...],
                      preferred_element_type=jnp.float32)
        acc = acc + b_ref[...]
        if i < n_layers - 1:          # ReLU on all but the last layer
            acc = jnp.maximum(acc, 0.0)
        h = acc
    out_ref[...] = h.astype(out_ref.dtype)


def _pack_params(params, pack=PACK):
    """Lane-pack params: W -> block-diag kron(I_pack, W) in bf16, b -> tiled f32."""
    packed = []
    for w, b in params:
        eye = jnp.eye(pack, dtype=w.dtype)
        wp = jnp.kron(eye, w).astype(jnp.bfloat16)      # (pack*in, pack*out)
        bp = jnp.tile(b.astype(jnp.float32), (1, pack))  # (1, pack*out)
        packed.append((wp, bp))
    return packed


def _mlp_fused_call(x2d, packed_params, max_tile_p=1536):
    """One pallas_call applying the whole MLP to a (rows, feat_in) array."""
    rows, in_dim = x2d.shape
    n_layers = len(packed_params)
    out_dim_p = packed_params[-1][0].shape[1]
    out_dim = out_dim_p // PACK

    # Pack PACK rows onto the lane axis (contiguous reshape -> no copy).
    pad = (-rows) % PACK
    if pad:
        # TODO(synk): rows % 8 != 0 pays one pad copy of x; common case avoids it.
        x2d = jnp.pad(x2d, ((0, pad), (0, 0)))
    prows = (rows + pad) // PACK
    xp = x2d.reshape(prows, PACK * in_dim)

    # Row-tile selection: as big as the VMEM budget allows; for mid-size
    # problems force >=2 grid steps so both v7x TensorCores are used.
    if prows > max_tile_p:
        tile_p = max_tile_p
    elif prows > 1024:
        tile_p = -(-((prows + 1) // 2) // 8) * 8   # ~half, 8-aligned -> grid>=2
    else:
        tile_p = max(prows, 1)                     # single full-extent block
    grid = (pl.cdiv(prows, tile_p),)               # ragged last block is masked

    in_specs = [pl.BlockSpec((tile_p, PACK * in_dim), lambda i: (i, 0))]
    flat_args = [xp]
    for wp, bp in packed_params:
        d_in, d_out = wp.shape
        # Constant index_map -> weights / biases stay VMEM-resident across grid.
        in_specs.append(pl.BlockSpec((d_in, d_out), lambda i: (0, 0)))
        in_specs.append(pl.BlockSpec((1, d_out), lambda i: (0, 0)))
        flat_args.append(wp)
        flat_args.append(bp)

    out = pl.pallas_call(
        functools.partial(_mlp_fused_kernel, n_layers=n_layers),
        out_shape=jax.ShapeDtypeStruct((prows, out_dim_p), x2d.dtype),
        grid=grid,
        in_specs=in_specs,
        out_specs=pl.BlockSpec((tile_p, out_dim_p), lambda i: (i, 0)),
        compiler_params=pltpu.CompilerParams(
            dimension_semantics=("parallel",),
            vmem_limit_bytes=32 * 1024 * 1024,
        ),
    )(*flat_args)

    out = out.reshape(prows * PACK, out_dim)   # free contiguous un-packing
    if pad:
        out = out[:rows]
    return out


def init_mlp_params(key, layer_sizes, dtype=jnp.float32):
    """Deterministic init matching nn.Linear's default U(-1/sqrt(in), 1/sqrt(in))."""
    params = []
    for in_dim, out_dim in zip(layer_sizes[:-1], layer_sizes[1:]):
        key, kw, kb = jax.random.split(key, 3)
        bound = 1.0 / jnp.sqrt(jnp.array(in_dim, dtype))
        # Stored as (in_dim, out_dim) == PyTorch weight.T
        w = jax.random.uniform(kw, (in_dim, out_dim), dtype, -bound, bound)
        b = jax.random.uniform(kb, (1, out_dim), dtype, -bound, bound)
        params.append((w, b))
    return params


def mlp_forward(x, params):
    """Applies the MLP to the final dimension of x, ReLU between hidden layers."""
    lead_shape = x.shape[:-1]
    x2d = x.reshape(-1, x.shape[-1])
    out2d = _mlp_fused_call(x2d, _pack_params(params))
    return out2d.reshape(*lead_shape, -1)


if __name__ == "__main__":
    # MLP(32, 64, 48, 16): 3 Linear layers, ReLU after the first two.
    layer_sizes = (32, 64, 48, 16)
    key = jax.random.PRNGKey(0)
    key, kx = jax.random.split(key)

    # Input (..., feat_in) with leading dims (batch=2, seq=8)
    x = jax.random.normal(kx, (2, 8, layer_sizes[0]), jnp.float32)

    params = init_mlp_params(key, layer_sizes)

    out = mlp_forward(x, params)
    out = jax.block_until_ready(out)
    assert out.shape == (2, 8, layer_sizes[-1]), out.shape

    # Reference 1: same math as the kernel (bf16 matmul, f32 accumulate/bias).
    h = x.reshape(-1, layer_sizes[0]).astype(jnp.float32)
    for i, (w, b) in enumerate(params):
        h = jnp.dot(h.astype(jnp.bfloat16), w.astype(jnp.bfloat16),
                    preferred_element_type=jnp.float32) + b
        if i < len(params) - 1:
            h = jnp.maximum(h, 0.0)
    ref_bf16 = h.reshape(2, 8, layer_sizes[-1])
    assert jnp.allclose(out, ref_bf16, atol=1e-3, rtol=1e-3), \
        float(jnp.max(jnp.abs(out - ref_bf16)))

    # Reference 2: full f32 math (loose tolerance = expected bf16 quantization).
    h = x.reshape(-1, layer_sizes[0])
    for i, (w, b) in enumerate(params):
        h = h @ w + b
        if i < len(params) - 1:
            h = jnp.maximum(h, 0.0)
    ref_f32 = h.reshape(2, 8, layer_sizes[-1])
    assert jnp.allclose(out, ref_f32, atol=1e-1, rtol=1e-1), \
        float(jnp.max(jnp.abs(out - ref_f32)))

    print("KERNEL_OK")
</pallas_src>

<mosaic_0001>
module attributes {stable_mosaic.version = 11 : i64} {
  func.func @_mlp_fused_kernel(%arg0: i32, %arg1: memref<2x256xf32, #tpu.memory_space<vmem>>, %arg2: memref<256x512xbf16, #tpu.memory_space<vmem>>, %arg3: memref<1x512xf32, #tpu.memory_space<vmem>>, %arg4: memref<512x384xbf16, #tpu.memory_space<vmem>>, %arg5: memref<1x384xf32, #tpu.memory_space<vmem>>, %arg6: memref<384x128xbf16, #tpu.memory_space<vmem>>, %arg7: memref<1x128xf32, #tpu.memory_space<vmem>>, %arg8: memref<2x128xf32, #tpu.memory_space<vmem>>) attributes {dimension_semantics = [#tpu.dimension_semantics<parallel>], iteration_bounds = array<i64: 1>, scalar_prefetch = 0 : i64, scratch_operands = 0 : i64, tpu.core_type = #tpu.core_type<tc>, window_params = [{transform_indices = @transform_0, window_bounds = array<i64: 2, 256>}, {pipeline_mode = #tpu.pipeline_mode<synchronous>, transform_indices = @transform_1, window_bounds = array<i64: 256, 512>}, {pipeline_mode = #tpu.pipeline_mode<synchronous>, transform_indices = @transform_2, window_bounds = array<i64: 1, 512>}, {pipeline_mode = #tpu.pipeline_mode<synchronous>, transform_indices = @transform_3, window_bounds = array<i64: 512, 384>}, {pipeline_mode = #tpu.pipeline_mode<synchronous>, transform_indices = @transform_4, window_bounds = array<i64: 1, 384>}, {pipeline_mode = #tpu.pipeline_mode<synchronous>, transform_indices = @transform_5, window_bounds = array<i64: 384, 128>}, {pipeline_mode = #tpu.pipeline_mode<synchronous>, transform_indices = @transform_6, window_bounds = array<i64: 1, 128>}, {transform_indices = @transform_7, window_bounds = array<i64: 2, 128>}]} {
    %c0 = arith.constant 0 : index
    %c0_0 = arith.constant 0 : index
    %0 = vector.load %arg1[%c0, %c0_0] : memref<2x256xf32, #tpu.memory_space<vmem>>, vector<2x256xf32>
    %1 = arith.truncf %0 : vector<2x256xf32> to vector<2x256xbf16>
    %c0_1 = arith.constant 0 : index
    %c0_2 = arith.constant 0 : index
    %2 = vector.load %arg2[%c0_1, %c0_2] : memref<256x512xbf16, #tpu.memory_space<vmem>>, vector<256x512xbf16>
    %cst = arith.constant dense<0.000000e+00> : vector<2x512xf32>
    %3 = tpu.matmul %1, %2, %cst {dimension_numbers = #tpu.dot_dimension_numbers<[1], [0], [0], [1], [0, 0, 1, 1], [], []>} : vector<2x256xbf16>, vector<256x512xbf16>, vector<2x512xf32> -> vector<2x512xf32>
    %c0_3 = arith.constant 0 : index
    %c0_4 = arith.constant 0 : index
    %4 = vector.load %arg3[%c0_3, %c0_4] : memref<1x512xf32, #tpu.memory_space<vmem>>, vector<1x512xf32>
    %5 = vector.broadcast %4 : vector<1x512xf32> to vector<2x512xf32>
    %6 = arith.addf %3, %5 : vector<2x512xf32>
    %cst_5 = arith.constant 0.000000e+00 : f32
    %7 = vector.broadcast %cst_5 : f32 to vector<2x512xf32>
    %8 = arith.maximumf %6, %7 : vector<2x512xf32>
    %9 = arith.truncf %8 : vector<2x512xf32> to vector<2x512xbf16>
    %c0_6 = arith.constant 0 : index
    %c0_7 = arith.constant 0 : index
    %10 = vector.load %arg4[%c0_6, %c0_7] : memref<512x384xbf16, #tpu.memory_space<vmem>>, vector<512x384xbf16>
    %cst_8 = arith.constant dense<0.000000e+00> : vector<2x384xf32>
    %11 = tpu.matmul %9, %10, %cst_8 {dimension_numbers = #tpu.dot_dimension_numbers<[1], [0], [0], [1], [0, 0, 1, 1], [], []>} : vector<2x512xbf16>, vector<512x384xbf16>, vector<2x384xf32> -> vector<2x384xf32>
    %c0_9 = arith.constant 0 : index
    %c0_10 = arith.constant 0 : index
    %12 = vector.load %arg5[%c0_9, %c0_10] : memref<1x384xf32, #tpu.memory_space<vmem>>, vector<1x384xf32>
    %13 = vector.broadcast %12 : vector<1x384xf32> to vector<2x384xf32>
    %14 = arith.addf %11, %13 : vector<2x384xf32>
    %cst_11 = arith.constant 0.000000e+00 : f32
    %15 = vector.broadcast %cst_11 : f32 to vector<2x384xf32>
    %16 = arith.maximumf %14, %15 : vector<2x384xf32>
    %17 = arith.truncf %16 : vector<2x384xf32> to vector<2x384xbf16>
    %c0_12 = arith.constant 0 : index
    %c0_13 = arith.constant 0 : index
    %18 = vector.load %arg6[%c0_12, %c0_13] : memref<384x128xbf16, #tpu.memory_space<vmem>>, vector<384x128xbf16>
    %cst_14 = arith.constant dense<0.000000e+00> : vector<2x128xf32>
    %19 = tpu.matmul %17, %18, %cst_14 {dimension_numbers = #tpu.dot_dimension_numbers<[1], [0], [0], [1], [0, 0, 1, 1], [], []>} : vector<2x384xbf16>, vector<384x128xbf16>, vector<2x128xf32> -> vector<2x128xf32>
    %c0_15 = arith.constant 0 : index
    %c0_16 = arith.constant 0 : index
    %20 = vector.load %arg7[%c0_15, %c0_16] : memref<1x128xf32, #tpu.memory_space<vmem>>, vector<1x128xf32>
    %21 = vector.broadcast %20 : vector<1x128xf32> to vector<2x128xf32>
    %22 = arith.addf %19, %21 : vector<2x128xf32>
    %c0_17 = arith.constant 0 : index
    %c0_18 = arith.constant 0 : index
    %23 = vector.load %arg8[%c0_17, %c0_18] : memref<2x128xf32, #tpu.memory_space<vmem>>, vector<2x128xf32>
    tpu.vector_store %arg8[%c0_17, %c0_18], %22 {strides = array<i32>} : memref<2x128xf32, #tpu.memory_space<vmem>>, vector<2x128xf32>,
    return
  }
  func.func @transform_0(%arg0: i32) -> (i32, i32) {
    %c0_i32 = arith.constant 0 : i32
    %c0_i32_0 = arith.constant 0 : i32
    return %arg0, %c0_i32 : i32, i32
  }
  func.func @transform_1(%arg0: i32) -> (i32, i32) {
    %c0_i32 = arith.constant 0 : i32
    %c0_i32_0 = arith.constant 0 : i32
    %c0_i32_1 = arith.constant 0 : i32
    return %c0_i32, %c0_i32_0 : i32, i32
  }
  func.func @transform_2(%arg0: i32) -> (i32, i32) {
    %c0_i32 = arith.constant 0 : i32
    %c0_i32_0 = arith.constant 0 : i32
    %c0_i32_1 = arith.constant 0 : i32
    return %c0_i32, %c0_i32_0 : i32, i32
  }
  func.func @transform_3(%arg0: i32) -> (i32, i32) {
    %c0_i32 = arith.constant 0 : i32
    %c0_i32_0 = arith.constant 0 : i32
    %c0_i32_1 = arith.constant 0 : i32
    return %c0_i32, %c0_i32_0 : i32, i32
  }
  func.func @transform_4(%arg0: i32) -> (i32, i32) {
    %c0_i32 = arith.constant 0 : i32
    %c0_i32_0 = arith.constant 0 : i32
    %c0_i32_1 = arith.constant 0 : i32
    return %c0_i32, %c0_i32_0 : i32, i32
  }
  func.func @transform_5(%arg0: i32) -> (i32, i32) {
    %c0_i32 = arith.constant 0 : i32
    %c0_i32_0 = arith.constant 0 : i32
    %c0_i32_1 = arith.constant 0 : i32
    return %c0_i32, %c0_i32_0 : i32, i32
  }
  func.func @transform_6(%arg0: i32) -> (i32, i32) {
    %c0_i32 = arith.constant 0 : i32
    %c0_i32_0 = arith.constant 0 : i32
    %c0_i32_1 = arith.constant 0 : i32
    return %c0_i32, %c0_i32_0 : i32, i32
  }
  func.func @transform_7(%arg0: i32) -> (i32, i32) {
    %c0_i32 = arith.constant 0 : i32
    %c0_i32_0 = arith.constant 0 : i32
    return %arg0, %c0_i32 : i32, i32
  }
}

</mosaic_0001>

<llo_original>
// kernel: tpu_custom_call.1
$region0: #{tpu_custom_call.1}
  #allocation0 [shape = 'u32[]', space=smem, size = 0x4, offset = 0x4, fixed_abs, tag = 'smem constant byte address 0x4 - core index']
  #allocation1 [shape = 'u32[144,128]{1,0:T(1,128)}', space=vmem, size = 0x12000, scoped, tag = 'internal scratch']
  %s0 = inlined_call_operand.hbm [shape: f32[2,256], index: 0, kind: input, shape index: {}]
  %s1 = inlined_call_operand.hbm [shape: bf16[256,512], index: 1, kind: input, shape index: {}]
  %s2 = inlined_call_operand.vmem [shape: f32[1,512], index: 2, kind: input, shape index: {}]
  %s3 = inlined_call_operand.hbm [shape: bf16[512,384], index: 3, kind: input, shape index: {}]
  %s4 = inlined_call_operand.vmem [shape: f32[1,384], index: 4, kind: input, shape index: {}]
  %s5 = inlined_call_operand.hbm [shape: bf16[384,128], index: 5, kind: input, shape index: {}]
  %s6 = inlined_call_operand.vmem [shape: f32[1,128], index: 6, kind: input, shape index: {}]
  %s7 = inlined_call_operand.hbm [shape: f32[2,128], index: 7, kind: output, shape index: {}]
  %s8 = sld [smem:[#allocation0]]
  $region54: #{tpu_custom_call.1} parent=0
    _
  %s10 = ssub.s32 1, %s8
  %s11 = scalar_select 0, %s10, %s8
  $region1: #{tpu_custom_call.1} parent=0
    #allocation2 [shape = 'u8[2048]{0}', space=vmem, size = 0x800, scoped, tag = 'input window, operand 0, single buffered']
    #allocation3 [shape = 's32[1]{0}', space=sflag, size = 0x4, scoped, tag = 'scoped memory for tpu_custom_call.1']
    #allocation4 [shape = 's32[1]{0}', space=sflag, size = 0x4, scoped, tag = 'scoped memory for tpu_custom_call.1']
    #allocation5 [shape = 'u8[262144]{0}', space=vmem, size = 0x40000, scoped, tag = 'input window, operand 1, single buffered']
    #allocation6 [shape = 's32[1]{0}', space=sflag, size = 0x4, scoped, tag = 'scoped memory for tpu_custom_call.1']
    #allocation7 [shape = 'u8[393216]{0}', space=vmem, size = 0x60000, scoped, tag = 'input window, operand 3, single buffered']
    #allocation8 [shape = 'u8[98304]{0}', space=vmem, size = 0x18000, scoped, tag = 'input window, operand 5, single buffered']
    #allocation9 [shape = 's32[1]{0}', space=sflag, size = 0x4, scoped, tag = 'scoped memory for tpu_custom_call.1']
    #allocation10 [shape = 'u8[1024]{0}', space=vmem, size = 0x400, scoped, tag = 'output window, operand 0, single buffered']
    %12 = vsyncpa [#allocation3], 0
    %13 = vsyncpa [#allocation6], 0
    %14 = vsyncpa [#allocation9], 0
    %15 = vsyncpa [#allocation4], 0
    // Predicated region
    $region2: #{tpu_custom_call.1} parent=1 // pred_check
      _
    $region3: #{tpu_custom_call.1} parent=1 // pred_check_branch
      %17 = sbr.rel (0) target = $region5
    $region4: #{tpu_custom_call.1} parent=1 // pred_region
      %s19 = ssub.s32 64, 64
      %20 = vsyncadd [#allocation3], %s19
      %s22 = sshll.u32 [#allocation2], 4
      %s23 = int_to_ptr.vmem [resolvable:$true] %s22
      %25 = dma.hbm_to_vmem [thread:$0]  %s0, 64, %s23, [#allocation3]
    $region5: #{tpu_custom_call.1} parent=1 // pred_fallthru
      _
    // Predicated region
    $region6: #{tpu_custom_call.1} parent=1 // pred_check
      _
    $region7: #{tpu_custom_call.1} parent=1 // pred_check_branch
      %27 = sbr.rel (0) target = $region9
    $region8: #{tpu_custom_call.1} parent=1 // pred_region
      %s29 = ssub.s32 8192, 8192
      %30 = vsyncadd [#allocation6], %s29
      %s31 = sshll.u32 [#allocation5], 4
      %s32 = int_to_ptr.vmem [resolvable:$true] %s31
      %37 = dma.hbm_to_vmem [thread:$0]  %s1, 8192, %s32, [#allocation6], 256, 256, 16
    $region9: #{tpu_custom_call.1} parent=1 // pred_fallthru
      _
    // Predicated region
    $region10: #{tpu_custom_call.1} parent=1 // pred_check
      _
    $region11: #{tpu_custom_call.1} parent=1 // pred_check_branch
      %39 = sbr.rel (0) target = $region13
    $region12: #{tpu_custom_call.1} parent=1 // pred_region
      _
    $region13: #{tpu_custom_call.1} parent=1 // pred_fallthru
      _
    // Predicated region
    $region14: #{tpu_custom_call.1} parent=1 // pred_check
      _
    $region15: #{tpu_custom_call.1} parent=1 // pred_check_branch
      %41 = sbr.rel (0) target = $region17
    $region16: #{tpu_custom_call.1} parent=1 // pred_region
      %s43 = ssub.s32 12288, 12288
      %44 = vsyncadd [#allocation6], %s43
      %s45 = sshll.u32 [#allocation7], 4
      %s46 = int_to_ptr.vmem [resolvable:$true] %s45
      %51 = dma.hbm_to_vmem [thread:$0]  %s3, 12288, %s46, [#allocation6], 192, 192, 12
    $region17: #{tpu_custom_call.1} parent=1 // pred_fallthru
      _
    // Predicated region
    $region18: #{tpu_custom_call.1} parent=1 // pred_check
      _
    $region19: #{tpu_custom_call.1} parent=1 // pred_check_branch
      %53 = sbr.rel (0) target = $region21
    $region20: #{tpu_custom_call.1} parent=1 // pred_region
      _
    $region21: #{tpu_custom_call.1} parent=1 // pred_fallthru
      _
    // Predicated region
    $region22: #{tpu_custom_call.1} parent=1 // pred_check
      _
    $region23: #{tpu_custom_call.1} parent=1 // pred_check_branch
      %55 = sbr.rel (0) target = $region25
    $region24: #{tpu_custom_call.1} parent=1 // pred_region
      %s57 = ssub.s32 3072, 3072
      %58 = vsyncadd [#allocation9], %s57
      %s59 = sshll.u32 [#allocation8], 4
      %s60 = int_to_ptr.vmem [resolvable:$true] %s59
      %65 = dma.hbm_to_vmem [thread:$0]  %s5, 3072, %s60, [#allocation9], 64, 64, 4
    $region25: #{tpu_custom_call.1} parent=1 // pred_fallthru
      _
    // Predicated region
    $region26: #{tpu_custom_call.1} parent=1 // pred_check
      _
    $region27: #{tpu_custom_call.1} parent=1 // pred_check_branch
      %67 = sbr.rel (0) target = $region29
    $region28: #{tpu_custom_call.1} parent=1 // pred_region
      _
    $region29: #{tpu_custom_call.1} parent=1 // pred_fallthru
      _
    // Predicated region
    $region30: #{tpu_custom_call.1} parent=1 // pred_check
      _
    $region31: #{tpu_custom_call.1} parent=1 // pred_check_branch
      %69 = sbr.rel (0) target = $region33
    $region32: #{tpu_custom_call.1} parent=1 // pred_region
      %70 = dma.done [#allocation3], 64
    $region33: #{tpu_custom_call.1} parent=1 // pred_fallthru
      _
    // Predicated region
    $region34: #{tpu_custom_call.1} parent=1 // pred_check
      _
    $region35: #{tpu_custom_call.1} parent=1 // pred_check_branch
      %72 = sbr.rel (0) target = $region37
    $region36: #{tpu_custom_call.1} parent=1 // pred_region
      %73 = dma.done [#allocation6], 8192
    $region37: #{tpu_custom_call.1} parent=1 // pred_fallthru
      _
    // Predicated region
    $region38: #{tpu_custom_call.1} parent=1 // pred_check
      _
    $region39: #{tpu_custom_call.1} parent=1 // pred_check_branch
      %75 = sbr.rel (0) target = $region41
    $region40: #{tpu_custom_call.1} parent=1 // pred_region
      %76 = dma.done [#allocation6], 12288
    $region41: #{tpu_custom_call.1} parent=1 // pred_fallthru
      _
    // Predicated region
    $region42: #{tpu_custom_call.1} parent=1 // pred_check
      _
    $region43: #{tpu_custom_call.1} parent=1 // pred_check_branch
      %78 = sbr.rel (0) target = $region45
    $region44: #{tpu_custom_call.1} parent=1 // pred_region
      %79 = dma.done [#allocation9], 3072
    $region45: #{tpu_custom_call.1} parent=1 // pred_fallthru
      _
    %v81 = vld [vmem:[#allocation2] sm:$0xf]
    %v84 = vunpack.c.l.s4 1983009808
    %v85 = vunpack.c.0.s8 %v84
    %v86 = vlaneseq
    %v87 = vshrl.u32 %v86, 7
    %v88 = vsub.s32 %v85, %v87
    %v89 = vrot.slane %v81, %v88
    %v90 = vcombine.high %v89, %v89
    %v93 = vpack.c.bf16 %v89, %v89
    %v94 = vpack.c.bf16 %v90, %v90
    %v95 = vld [vmem:[#allocation5] sm:$0xff]
    %v96 = vld [vmem:[#allocation5 + $0x8] sm:$0xff]
    %v97 = vld [vmem:[#allocation5 + $0x10] sm:$0xff]
    %v98 = vld [vmem:[#allocation5 + $0x18] sm:$0xff]
    %v99 = vld [vmem:[#allocation5 + $0x20] sm:$0xff]
    %v100 = vld [vmem:[#allocation5 + $0x28] sm:$0xff]
    %v101 = vld [vmem:[#allocation5 + $0x30] sm:$0xff]
    %v102 = vld [vmem:[#allocation5 + $0x38] sm:$0xff]
    %v103 = vld [vmem:[#allocation5 + $0x40] sm:$0xff]
    %v104 = vld [vmem:[#allocation5 + $0x48] sm:$0xff]
    %v105 = vld [vmem:[#allocation5 + $0x50] sm:$0xff]
    %v106 = vld [vmem:[#allocation5 + $0x58] sm:$0xff]
    %v107 = vld [vmem:[#allocation5 + $0x60] sm:$0xff]
    %v108 = vld [vmem:[#allocation5 + $0x68] sm:$0xff]
    %v109 = vld [vmem:[#allocation5 + $0x70] sm:$0xff]
    %v110 = vld [vmem:[#allocation5 + $0x78] sm:$0xff]
    %v111 = vld [vmem:[#allocation5 + $0x80] sm:$0xff]
    %v112 = vld [vmem:[#allocation5 + $0x88] sm:$0xff]
    %v113 = vld [vmem:[#allocation5 + $0x90] sm:$0xff]
    %v114 = vld [vmem:[#allocation5 + $0x98] sm:$0xff]
    %v115 = vld [vmem:[#allocation5 + $0xa0] sm:$0xff]
    %v116 = vld [vmem:[#allocation5 + $0xa8] sm:$0xff]
    %v117 = vld [vmem:[#allocation5 + $0xb0] sm:$0xff]
    %v118 = vld [vmem:[#allocation5 + $0xb8] sm:$0xff]
    %v119 = vld [vmem:[#allocation5 + $0xc0] sm:$0xff]
    %v120 = vld [vmem:[#allocation5 + $0xc8] sm:$0xff]
    %v121 = vld [vmem:[#allocation5 + $0xd0] sm:$0xff]
    %v122 = vld [vmem:[#allocation5 + $0xd8] sm:$0xff]
    %v123 = vld [vmem:[#allocation5 + $0xe0] sm:$0xff]
    %v124 = vld [vmem:[#allocation5 + $0xe8] sm:$0xff]
    %v125 = vld [vmem:[#allocation5 + $0xf0] sm:$0xff]
    %v126 = vld [vmem:[#allocation5 + $0xf8] sm:$0xff]
    %v127 = vld [vmem:[#allocation5 + $0x100] sm:$0xff]
    %v128 = vld [vmem:[#allocation5 + $0x108] sm:$0xff]
    %v129 = vld [vmem:[#allocation5 + $0x110] sm:$0xff]
    %v130 = vld [vmem:[#allocation5 + $0x118] sm:$0xff]
    %v131 = vld [vmem:[#allocation5 + $0x120] sm:$0xff]
    %v132 = vld [vmem:[#allocation5 + $0x128] sm:$0xff]
    %v133 = vld [vmem:[#allocation5 + $0x130] sm:$0xff]
    %v134 = vld [vmem:[#allocation5 + $0x138] sm:$0xff]
    %v135 = vld [vmem:[#allocation5 + $0x140] sm:$0xff]
    %v136 = vld [vmem:[#allocation5 + $0x148] sm:$0xff]
    %v137 = vld [vmem:[#allocation5 + $0x150] sm:$0xff]
    %v138 = vld [vmem:[#allocation5 + $0x158] sm:$0xff]
    %v139 = vld [vmem:[#allocation5 + $0x160] sm:$0xff]
    %v140 = vld [vmem:[#allocation5 + $0x168] sm:$0xff]
    %v141 = vld [vmem:[#allocation5 + $0x170] sm:$0xff]
    %v142 = vld [vmem:[#allocation5 + $0x178] sm:$0xff]
    %v143 = vld [vmem:[#allocation5 + $0x180] sm:$0xff]
    %v144 = vld [vmem:[#allocation5 + $0x188] sm:$0xff]
    %v145 = vld [vmem:[#allocation5 + $0x190] sm:$0xff]
    %v146 = vld [vmem:[#allocation5 + $0x198] sm:$0xff]
    %v147 = vld [vmem:[#allocation5 + $0x1a0] sm:$0xff]
    %v148 = vld [vmem:[#allocation5 + $0x1a8] sm:$0xff]
    %v149 = vld [vmem:[#allocation5 + $0x1b0] sm:$0xff]
    %v150 = vld [vmem:[#allocation5 + $0x1b8] sm:$0xff]
    %v151 = vld [vmem:[#allocation5 + $0x1c0] sm:$0xff]
    %v152 = vld [vmem:[#allocation5 + $0x1c8] sm:$0xff]
    %v153 = vld [vmem:[#allocation5 + $0x1d0] sm:$0xff]
    %v154 = vld [vmem:[#allocation5 + $0x1d8] sm:$0xff]
    %v155 = vld [vmem:[#allocation5 + $0x1e0] sm:$0xff]
    %v156 = vld [vmem:[#allocation5 + $0x1e8] sm:$0xff]
    %v157 = vld [vmem:[#allocation5 + $0x1f0] sm:$0xff]
    %v158 = vld [vmem:[#allocation5 + $0x1f8] sm:$0xff]
    %v159 = vld [vmem:[%s2] sm:$0xf]
    %v161 = vlaneseq
    %v162 = vshrl.u32 %v161, 7
    %v163 = vsub.s32 0, %v162
    %v164 = vrot.slane %v159, %v163
    %v165 = vlaneseq
    %v166 = vshrl.u32 %v165, 7
    %v167 = vsub.s32 1, %v166
    %v168 = vrot.slane %v159, %v167
    %v169 = vlaneseq
    %v170 = vshrl.u32 %v169, 7
    %v171 = vsub.s32 2, %v170
    %v172 = vrot.slane %v159, %v171
    %v173 = vlaneseq
    %v174 = vshrl.u32 %v173, 7
    %v175 = vsub.s32 3, %v174
    %v176 = vrot.slane %v159, %v175
    %v245 = vunpack.c.l.b16 %v95
    %v246 = vunpack.c.h.b16 %v95
    %v247 = vunpack.c.l.b16 %v96
    %v248 = vunpack.c.h.b16 %v96
    %v249 = vunpack.c.l.b16 %v97
    %v250 = vunpack.c.h.b16 %v97
    %v251 = vunpack.c.l.b16 %v98
    %v252 = vunpack.c.h.b16 %v98
    %v253 = vunpack.c.l.b16 %v99
    %v254 = vunpack.c.h.b16 %v99
    %v255 = vunpack.c.l.b16 %v100
    %v256 = vunpack.c.h.b16 %v100
    %v257 = vunpack.c.l.b16 %v101
    %v258 = vunpack.c.h.b16 %v101
    %v259 = vunpack.c.l.b16 %v102
    %v260 = vunpack.c.h.b16 %v102
    %v261 = vunpack.c.l.b16 %v103
    %v262 = vunpack.c.h.b16 %v103
    %v263 = vunpack.c.l.b16 %v104
    %v264 = vunpack.c.h.b16 %v104
    %v265 = vunpack.c.l.b16 %v105
    %v266 = vunpack.c.h.b16 %v105
    %v267 = vunpack.c.l.b16 %v106
    %v268 = vunpack.c.h.b16 %v106
    %v269 = vunpack.c.l.b16 %v107
    %v270 = vunpack.c.h.b16 %v107
    %v271 = vunpack.c.l.b16 %v108
    %v272 = vunpack.c.h.b16 %v108
    %v273 = vunpack.c.l.b16 %v109
    %v274 = vunpack.c.h.b16 %v109
    %v275 = vunpack.c.l.b16 %v110
    %v276 = vunpack.c.h.b16 %v110
    %v277 = vunpack.c.l.b16 %v111
    %v278 = vunpack.c.h.b16 %v111
    %v279 = vunpack.c.l.b16 %v112
    %v280 = vunpack.c.h.b16 %v112
    %v281 = vunpack.c.l.b16 %v113
    %v282 = vunpack.c.h.b16 %v113
    %v283 = vunpack.c.l.b16 %v114
    %v284 = vunpack.c.h.b16 %v114
    %v285 = vunpack.c.l.b16 %v115
    %v286 = vunpack.c.h.b16 %v115
    %v287 = vunpack.c.l.b16 %v116
    %v288 = vunpack.c.h.b16 %v116
    %v289 = vunpack.c.l.b16 %v117
    %v290 = vunpack.c.h.b16 %v117
    %v291 = vunpack.c.l.b16 %v118
    %v292 = vunpack.c.h.b16 %v118
    %v293 = vunpack.c.l.b16 %v119
    %v294 = vunpack.c.h.b16 %v119
    %v295 = vunpack.c.l.b16 %v120
    %v296 = vunpack.c.h.b16 %v120
    %v297 = vunpack.c.l.b16 %v121
    %v298 = vunpack.c.h.b16 %v121
    %v299 = vunpack.c.l.b16 %v122
    %v300 = vunpack.c.h.b16 %v122
    %v301 = vunpack.c.l.b16 %v123
    %v302 = vunpack.c.h.b16 %v123
    %v303 = vunpack.c.l.b16 %v124
    %v304 = vunpack.c.h.b16 %v124
    %v305 = vunpack.c.l.b16 %v125
    %v306 = vunpack.c.h.b16 %v125
    %v307 = vunpack.c.l.b16 %v126
    %v308 = vunpack.c.h.b16 %v126
    %v309 = vunpack.c.l.b16 %v127
    %v310 = vunpack.c.h.b16 %v127
    %v311 = vunpack.c.l.b16 %v128
    %v312 = vunpack.c.h.b16 %v128
    %v313 = vunpack.c.l.b16 %v129
    %v314 = vunpack.c.h.b16 %v129
    %v315 = vunpack.c.l.b16 %v130
    %v316 = vunpack.c.h.b16 %v130
    %v317 = vunpack.c.l.b16 %v131
    %v318 = vunpack.c.h.b16 %v131
    %v319 = vunpack.c.l.b16 %v132
    %v320 = vunpack.c.h.b16 %v132
    %v321 = vunpack.c.l.b16 %v133
    %v322 = vunpack.c.h.b16 %v133
    %v323 = vunpack.c.l.b16 %v134
    %v324 = vunpack.c.h.b16 %v134
    %v325 = vunpack.c.l.b16 %v135
    %v326 = vunpack.c.h.b16 %v135
    %v327 = vunpack.c.l.b16 %v136
    %v328 = vunpack.c.h.b16 %v136
    %v329 = vunpack.c.l.b16 %v137
    %v330 = vunpack.c.h.b16 %v137
    %v331 = vunpack.c.l.b16 %v138
    %v332 = vunpack.c.h.b16 %v138
    %v333 = vunpack.c.l.b16 %v139
    %v334 = vunpack.c.h.b16 %v139
    %v335 = vunpack.c.l.b16 %v140
    %v336 = vunpack.c.h.b16 %v140
    %v337 = vunpack.c.l.b16 %v141
    %v338 = vunpack.c.h.b16 %v141
    %v339 = vunpack.c.l.b16 %v142
    %v340 = vunpack.c.h.b16 %v142
    %v341 = vunpack.c.l.b16 %v143
    %v342 = vunpack.c.h.b16 %v143
    %v343 = vunpack.c.l.b16 %v144
    %v344 = vunpack.c.h.b16 %v144
    %v345 = vunpack.c.l.b16 %v145
    %v346 = vunpack.c.h.b16 %v145
    %v347 = vunpack.c.l.b16 %v146
    %v348 = vunpack.c.h.b16 %v146
    %v349 = vunpack.c.l.b16 %v147
    %v350 = vunpack.c.h.b16 %v147
    %v351 = vunpack.c.l.b16 %v148
    %v352 = vunpack.c.h.b16 %v148
    %v353 = vunpack.c.l.b16 %v149
    %v354 = vunpack.c.h.b16 %v149
    %v355 = vunpack.c.l.b16 %v150
    %v356 = vunpack.c.h.b16 %v150
    %v357 = vunpack.c.l.b16 %v151
    %v358 = vunpack.c.h.b16 %v151
    %v359 = vunpack.c.l.b16 %v152
    %v360 = vunpack.c.h.b16 %v152
    %v361 = vunpack.c.l.b16 %v153
    %v362 = vunpack.c.h.b16 %v153
    %v363 = vunpack.c.l.b16 %v154
    %v364 = vunpack.c.h.b16 %v154
    %v365 = vunpack.c.l.b16 %v155
    %v366 = vunpack.c.h.b16 %v155
    %v367 = vunpack.c.l.b16 %v156
    %v368 = vunpack.c.h.b16 %v156
    %v369 = vunpack.c.l.b16 %v157
    %v370 = vunpack.c.h.b16 %v157
    %v371 = vunpack.c.l.b16 %v158
    %v372 = vunpack.c.h.b16 %v158
    %v373 = vpack.c.b16 %v249, %v245
    %v374 = vpack.c.b16 %v250, %v246
    %v375 = vpack.c.b16 %v251, %v247
    %v376 = vpack.c.b16 %v252, %v248
    %v377 = vpack.c.b16 %v257, %v253
    %v378 = vpack.c.b16 %v258, %v254
    %v379 = vpack.c.b16 %v259, %v255
    %v380 = vpack.c.b16 %v260, %v256
    %v381 = vpack.c.b16 %v265, %v261
    %v382 = vpack.c.b16 %v266, %v262
    %v383 = vpack.c.b16 %v267, %v263
    %v384 = vpack.c.b16 %v268, %v264
    %v385 = vpack.c.b16 %v273, %v269
    %v386 = vpack.c.b16 %v274, %v270
    %v387 = vpack.c.b16 %v275, %v271
    %v388 = vpack.c.b16 %v276, %v272
    %v389 = vpack.c.b16 %v281, %v277
    %v390 = vpack.c.b16 %v282, %v278
    %v391 = vpack.c.b16 %v283, %v279
    %v392 = vpack.c.b16 %v284, %v280
    %v393 = vpack.c.b16 %v289, %v285
    %v394 = vpack.c.b16 %v290, %v286
    %v395 = vpack.c.b16 %v291, %v287
    %v396 = vpack.c.b16 %v292, %v288
    %v397 = vpack.c.b16 %v297, %v293
    %v398 = vpack.c.b16 %v298, %v294
    %v399 = vpack.c.b16 %v299, %v295
    %v400 = vpack.c.b16 %v300, %v296
    %v401 = vpack.c.b16 %v305, %v301
    %v402 = vpack.c.b16 %v306, %v302
    %v403 = vpack.c.b16 %v307, %v303
    %v404 = vpack.c.b16 %v308, %v304
    %v405 = vpack.c.b16 %v313, %v309
    %v406 = vpack.c.b16 %v314, %v310
    %v407 = vpack.c.b16 %v315, %v311
    %v408 = vpack.c.b16 %v316, %v312
    %v409 = vpack.c.b16 %v321, %v317
    %v410 = vpack.c.b16 %v322, %v318
    %v411 = vpack.c.b16 %v323, %v319
    %v412 = vpack.c.b16 %v324, %v320
    %v413 = vpack.c.b16 %v329, %v325
    %v414 = vpack.c.b16 %v330, %v326
    %v415 = vpack.c.b16 %v331, %v327
    %v416 = vpack.c.b16 %v332, %v328
    %v417 = vpack.c.b16 %v337, %v333
    %v418 = vpack.c.b16 %v338, %v334
    %v419 = vpack.c.b16 %v339, %v335
    %v420 = vpack.c.b16 %v340, %v336
    %v421 = vpack.c.b16 %v345, %v341
    %v422 = vpack.c.b16 %v346, %v342
    %v423 = vpack.c.b16 %v347, %v343
    %v424 = vpack.c.b16 %v348, %v344
    %v425 = vpack.c.b16 %v353, %v349
    %v426 = vpack.c.b16 %v354, %v350
    %v427 = vpack.c.b16 %v355, %v351
    %v428 = vpack.c.b16 %v356, %v352
    %v429 = vpack.c.b16 %v361, %v357
    %v430 = vpack.c.b16 %v362, %v358
    %v431 = vpack.c.b16 %v363, %v359
    %v432 = vpack.c.b16 %v364, %v360
    %v433 = vpack.c.b16 %v369, %v365
    %v434 = vpack.c.b16 %v370, %v366
    %v435 = vpack.c.b16 %v371, %v367
    %v436 = vpack.c.b16 %v372, %v368
    %501 = vmatprep.subr.bf16.mxu0 %v374
    %502 = vmatpush1.bf16.msra.mxu0 %v373
    %503 = vmatprep.subr.bf16.mxu0 %v378
    %504 = vmatpush1.bf16.msra.mxu0 %v377
    %505 = vmatprep.subr.bf16.mxu0 %v382
    %506 = vmatpush1.bf16.msra.mxu0 %v381
    %507 = vmatprep.subr.bf16.mxu0 %v386
    %508 = vmatpush1.bf16.msra.mxu0 %v385
    %509 = vmatprep.subr.bf16.mxu0 %v390
    %510 = vmatpush1.bf16.msra.mxu0 %v389
    %511 = vmatprep.subr.bf16.mxu0 %v394
    %512 = vmatpush1.bf16.msra.mxu0 %v393
    %513 = vmatprep.subr.bf16.mxu0 %v398
    %514 = vmatpush1.bf16.msra.mxu0 %v397
    %515 = vmatprep.subr.bf16.mxu0 %v402
    %516 = vmatpush1.bf16.msra.mxu0 %v401
    %517 = vmatprep.subr.bf16.mxu0 %v406
    %518 = vmatpush1.bf16.msra.mxu0 %v405
    %519 = vmatprep.subr.bf16.mxu0 %v410
    %520 = vmatpush1.bf16.msra.mxu0 %v409
    %521 = vmatprep.subr.bf16.mxu0 %v414
    %522 = vmatpush1.bf16.msra.mxu0 %v413
    %523 = vmatprep.subr.bf16.mxu0 %v418
    %524 = vmatpush1.bf16.msra.mxu0 %v417
    %525 = vmatprep.subr.bf16.mxu0 %v422
    %526 = vmatpush1.bf16.msra.mxu0 %v421
    %527 = vmatprep.subr.bf16.mxu0 %v426
    %528 = vmatpush1.bf16.msra.mxu0 %v425
    %529 = vmatprep.subr.bf16.mxu0 %v430
    %530 = vmatpush1.bf16.msra.mxu0 %v429
    %531 = vmatprep.subr.bf16.mxu0 %v434
    %532 = vmatpush1.bf16.msra.mxu0 %v433
    %533 = vmatprep.mubr.bf16.mxu0 %v94
    %534 = vmatmul.mubr.bf16.gmra.mrb[0].mxu0 %v93
    %v535 = vpop.f32.mrb[0].mxu0
    %v536 = vadd.f32 %v164, %v535
    %v537 = vpop.f32.mrb[0].mxu0
    %v538 = vadd.f32 %v168, %v537
    %v539 = vpop.f32.mrb[0].mxu0
    %v540 = vpop.f32.mrb[0].mxu0
    %541 = vdwg.mxu0
    %542 = vmatprep.subr.bf16.mxu0 %v376
    %543 = vmatpush1.bf16.msra.mxu0 %v375
    %544 = vmatprep.subr.bf16.mxu0 %v380
    %545 = vmatpush1.bf16.msra.mxu0 %v379
    %546 = vmatprep.subr.bf16.mxu0 %v384
    %547 = vmatpush1.bf16.msra.mxu0 %v383
    %548 = vmatprep.subr.bf16.mxu0 %v388
    %549 = vmatpush1.bf16.msra.mxu0 %v387
    %550 = vmatprep.subr.bf16.mxu0 %v392
    %551 = vmatpush1.bf16.msra.mxu0 %v391
    %552 = vmatprep.subr.bf16.mxu0 %v396
    %553 = vmatpush1.bf16.msra.mxu0 %v395
    %554 = vmatprep.subr.bf16.mxu0 %v400
    %555 = vmatpush1.bf16.msra.mxu0 %v399
    %556 = vmatprep.subr.bf16.mxu0 %v404
    %557 = vmatpush1.bf16.msra.mxu0 %v403
    %558 = vmatprep.subr.bf16.mxu0 %v408
    %559 = vmatpush1.bf16.msra.mxu0 %v407
    %560 = vmatprep.subr.bf16.mxu0 %v412
    %561 = vmatpush1.bf16.msra.mxu0 %v411
    %562 = vmatprep.subr.bf16.mxu0 %v416
    %563 = vmatpush1.bf16.msra.mxu0 %v415
    %564 = vmatprep.subr.bf16.mxu0 %v420
    %565 = vmatpush1.bf16.msra.mxu0 %v419
    %566 = vmatprep.subr.bf16.mxu0 %v424
    %567 = vmatpush1.bf16.msra.mxu0 %v423
    %568 = vmatprep.subr.bf16.mxu0 %v428
    %569 = vmatpush1.bf16.msra.mxu0 %v427
    %570 = vmatprep.subr.bf16.mxu0 %v432
    %571 = vmatpush1.bf16.msra.mxu0 %v431
    %572 = vmatprep.subr.bf16.mxu0 %v436
    %573 = vmatpush1.bf16.msra.mxu0 %v435
    %574 = vmatprep.mubr.bf16.mxu0 %v94
    %575 = vmatmul.mubr.bf16.gmra.mrb[0].mxu0 %v93
    %v576 = vpop.f32.mrb[0].mxu0
    %v577 = vadd.f32 %v172, %v576
    %v578 = vpop.f32.mrb[0].mxu0
    %v579 = vadd.f32 %v176, %v578
    %v580 = vpop.f32.mrb[0].mxu0
    %v581 = vpop.f32.mrb[0].mxu0
    %582 = vdwg.mxu0
    %v583 = vmax.f32 %v536, 0.0
    %v584 = vmax.f32 %v538, 0.0
    %v585 = vmax.f32 %v577, 0.0
    %v586 = vmax.f32 %v579, 0.0
    %v587 = vpack.c.bf16 %v583, %v583
    %v588 = vpack.c.bf16 %v584, %v584
    %v589 = vpack.c.bf16 %v585, %v585
    %v590 = vpack.c.bf16 %v586, %v586
    %v591 = vld [vmem:[#allocation7] sm:$0xff]
    %v592 = vld [vmem:[#allocation7 + $0x8] sm:$0xf]
    %v593 = vld [vmem:[#allocation7 + $0xc] sm:$0xff]
    %v594 = vld [vmem:[#allocation7 + $0x14] sm:$0xf]
    %v595 = vld [vmem:[#allocation7 + $0x18] sm:$0xff]
    %v596 = vld [vmem:[#allocation7 + $0x20] sm:$0xf]
    %v597 = vld [vmem:[#allocation7 + $0x24] sm:$0xff]
    %v598 = vld [vmem:[#allocation7 + $0x2c] sm:$0xf]
    %v599 = vld [vmem:[#allocation7 + $0x30] sm:$0xff]
    %v600 = vld [vmem:[#allocation7 + $0x38] sm:$0xf]
    %v601 = vld [vmem:[#allocation7 + $0x3c] sm:$0xff]
    %v602 = vld [vmem:[#allocation7 + $0x44] sm:$0xf]
    %v603 = vld [vmem:[#allocation7 + $0x48] sm:$0xff]
    %v604 = vld [vmem:[#allocation7 + $0x50] sm:$0xf]
    %v605 = vld [vmem:[#allocation7 + $0x54] sm:$0xff]
    %v606 = vld [vmem:[#allocation7 + $0x5c] sm:$0xf]
    %v607 = vld [vmem:[#allocation7 + $0x60] sm:$0xff]
    %v608 = vld [vmem:[#allocation7 + $0x68] sm:$0xf]
    %v609 = vld [vmem:[#allocation7 + $0x6c] sm:$0xff]
    %v610 = vld [vmem:[#allocation7 + $0x74] sm:$0xf]
    %v611 = vld [vmem:[#allocation7 + $0x78] sm:$0xff]
    %v612 = vld [vmem:[#allocation7 + $0x80] sm:$0xf]
    %v613 = vld [vmem:[#allocation7 + $0x84] sm:$0xff]
    %v614 = vld [vmem:[#allocation7 + $0x8c] sm:$0xf]
    %v615 = vld [vmem:[#allocation7 + $0x90] sm:$0xff]
    %v616 = vld [vmem:[#allocation7 + $0x98] sm:$0xf]
    %v617 = vld [vmem:[#allocation7 + $0x9c] sm:$0xff]
    %v618 = vld [vmem:[#allocation7 + $0xa4] sm:$0xf]
    %v619 = vld [vmem:[#allocation7 + $0xa8] sm:$0xff]
    %v620 = vld [vmem:[#allocation7 + $0xb0] sm:$0xf]
    %v621 = vld [vmem:[#allocation7 + $0xb4] sm:$0xff]
    %v622 = vld [vmem:[#allocation7 + $0xbc] sm:$0xf]
    %v623 = vld [vmem:[#allocation7 + $0xc0] sm:$0xff]
    %v624 = vld [vmem:[#allocation7 + $0xc8] sm:$0xf]
    %v625 = vld [vmem:[#allocation7 + $0xcc] sm:$0xff]
    %v626 = vld [vmem:[#allocation7 + $0xd4] sm:$0xf]
    %v627 = vld [vmem:[#allocation7 + $0xd8] sm:$0xff]
    %v628 = vld [vmem:[#allocation7 + $0xe0] sm:$0xf]
    %v629 = vld [vmem:[#allocation7 + $0xe4] sm:$0xff]
    %v630 = vld [vmem:[#allocation7 + $0xec] sm:$0xf]
    %v631 = vld [vmem:[#allocation7 + $0xf0] sm:$0xff]
    %v632 = vld [vmem:[#allocation7 + $0xf8] sm:$0xf]
    %v633 = vld [vmem:[#allocation7 + $0xfc] sm:$0xff]
    %v634 = vld [vmem:[#allocation7 + $0x104] sm:$0xf]
    %v635 = vld [vmem:[#allocation7 + $0x108] sm:$0xff]
    %v636 = vld [vmem:[#allocation7 + $0x110] sm:$0xf]
    %v637 = vld [vmem:[#allocation7 + $0x114] sm:$0xff]
    %v638 = vld [vmem:[#allocation7 + $0x11c] sm:$0xf]
    %v639 = vld [vmem:[#allocation7 + $0x120] sm:$0xff]
    %v640 = vld [vmem:[#allocation7 + $0x128] sm:$0xf]
    %v641 = vld [vmem:[#allocation7 + $0x12c] sm:$0xff]
    %v642 = vld [vmem:[#allocation7 + $0x134] sm:$0xf]
    %v643 = vld [vmem:[#allocation7 + $0x138] sm:$0xff]
    %v644 = vld [vmem:[#allocation7 + $0x140] sm:$0xf]
    %v645 = vld [vmem:[#allocation7 + $0x144] sm:$0xff]
    %v646 = vld [vmem:[#allocation7 + $0x14c] sm:$0xf]
    %v647 = vld [vmem:[#allocation7 + $0x150] sm:$0xff]
    %v648 = vld [vmem:[#allocation7 + $0x158] sm:$0xf]
    %v649 = vld [vmem:[#allocation7 + $0x15c] sm:$0xff]
    %v650 = vld [vmem:[#allocation7 + $0x164] sm:$0xf]
    %v651 = vld [vmem:[#allocation7 + $0x168] sm:$0xff]
    %v652 = vld [vmem:[#allocation7 + $0x170] sm:$0xf]
    %v653 = vld [vmem:[#allocation7 + $0x174] sm:$0xff]
    %v654 = vld [vmem:[#allocation7 + $0x17c] sm:$0xf]
    %v655 = vld [vmem:[#allocation7 + $0x180] sm:$0xff]
    %v656 = vld [vmem:[#allocation7 + $0x188] sm:$0xf]
    %v657 = vld [vmem:[#allocation7 + $0x18c] sm:$0xff]
    %v658 = vld [vmem:[#allocation7 + $0x194] sm:$0xf]
    %v659 = vld [vmem:[#allocation7 + $0x198] sm:$0xff]
    %v660 = vld [vmem:[#allocation7 + $0x1a0] sm:$0xf]
    %v661 = vld [vmem:[#allocation7 + $0x1a4] sm:$0xff]
    %v662 = vld [vmem:[#allocation7 + $0x1ac] sm:$0xf]
    %v663 = vld [vmem:[#allocation7 + $0x1b0] sm:$0xff]
    %v664 = vld [vmem:[#allocation7 + $0x1b8] sm:$0xf]
    %v665 = vld [vmem:[#allocation7 + $0x1bc] sm:$0xff]
    %v666 = vld [vmem:[#allocation7 + $0x1c4] sm:$0xf]
    %v667 = vld [vmem:[#allocation7 + $0x1c8] sm:$0xff]
    %v668 = vld [vmem:[#allocation7 + $0x1d0] sm:$0xf]
    %v669 = vld [vmem:[#allocation7 + $0x1d4] sm:$0xff]
    %v670 = vld [vmem:[#allocation7 + $0x1dc] sm:$0xf]
    %v671 = vld [vmem:[#allocation7 + $0x1e0] sm:$0xff]
    %v672 = vld [vmem:[#allocation7 + $0x1e8] sm:$0xf]
    %v673 = vld [vmem:[#allocation7 + $0x1ec] sm:$0xff]
    %v674 = vld [vmem:[#allocation7 + $0x1f4] sm:$0xf]
    %v675 = vld [vmem:[#allocation7 + $0x1f8] sm:$0xff]
    %v676 = vld [vmem:[#allocation7 + $0x200] sm:$0xf]
    %v677 = vld [vmem:[#allocation7 + $0x204] sm:$0xff]
    %v678 = vld [vmem:[#allocation7 + $0x20c] sm:$0xf]
    %v679 = vld [vmem:[#allocation7 + $0x210] sm:$0xff]
    %v680 = vld [vmem:[#allocation7 + $0x218] sm:$0xf]
    %v681 = vld [vmem:[#allocation7 + $0x21c] sm:$0xff]
    %v682 = vld [vmem:[#allocation7 + $0x224] sm:$0xf]
    %v683 = vld [vmem:[#allocation7 + $0x228] sm:$0xff]
    %v684 = vld [vmem:[#allocation7 + $0x230] sm:$0xf]
    %v685 = vld [vmem:[#allocation7 + $0x234] sm:$0xff]
    %v686 = vld [vmem:[#allocation7 + $0x23c] sm:$0xf]
    %v687 = vld [vmem:[#allocation7 + $0x240] sm:$0xff]
    %v688 = vld [vmem:[#allocation7 + $0x248] sm:$0xf]
    %v689 = vld [vmem:[#allocation7 + $0x24c] sm:$0xff]
    %v690 = vld [vmem:[#allocation7 + $0x254] sm:$0xf]
    %v691 = vld [vmem:[#allocation7 + $0x258] sm:$0xff]
    %v692 = vld [vmem:[#allocation7 + $0x260] sm:$0xf]
    %v693 = vld [vmem:[#allocation7 + $0x264] sm:$0xff]
    %v694 = vld [vmem:[#allocation7 + $0x26c] sm:$0xf]
    %v695 = vld [vmem:[#allocation7 + $0x270] sm:$0xff]
    %v696 = vld [vmem:[#allocation7 + $0x278] sm:$0xf]
    %v697 = vld [vmem:[#allocation7 + $0x27c] sm:$0xff]
    %v698 = vld [vmem:[#allocation7 + $0x284] sm:$0xf]
    %v699 = vld [vmem:[#allocation7 + $0x288] sm:$0xff]
    %v700 = vld [vmem:[#allocation7 + $0x290] sm:$0xf]
    %v701 = vld [vmem:[#allocation7 + $0x294] sm:$0xff]
    %v702 = vld [vmem:[#allocation7 + $0x29c] sm:$0xf]
    %v703 = vld [vmem:[#allocation7 + $0x2a0] sm:$0xff]
    %v704 = vld [vmem:[#allocation7 + $0x2a8] sm:$0xf]
    %v705 = vld [vmem:[#allocation7 + $0x2ac] sm:$0xff]
    %v706 = vld [vmem:[#allocation7 + $0x2b4] sm:$0xf]
    %v707 = vld [vmem:[#allocation7 + $0x2b8] sm:$0xff]
    %v708 = vld [vmem:[#allocation7 + $0x2c0] sm:$0xf]
    %v709 = vld [vmem:[#allocation7 + $0x2c4] sm:$0xff]
    %v710 = vld [vmem:[#allocation7 + $0x2cc] sm:$0xf]
    %v711 = vld [vmem:[#allocation7 + $0x2d0] sm:$0xff]
    %v712 = vld [vmem:[#allocation7 + $0x2d8] sm:$0xf]
    %v713 = vld [vmem:[#allocation7 + $0x2dc] sm:$0xff]
    %v714 = vld [vmem:[#allocation7 + $0x2e4] sm:$0xf]
    %v715 = vld [vmem:[#allocation7 + $0x2e8] sm:$0xff]
    %v716 = vld [vmem:[#allocation7 + $0x2f0] sm:$0xf]
    %v717 = vld [vmem:[#allocation7 + $0x2f4] sm:$0xff]
    %v718 = vld [vmem:[#allocation7 + $0x2fc] sm:$0xf]
    %v719 = vld [vmem:[%s4] sm:$0x7]
    %v721 = vlaneseq
    %v722 = vshrl.u32 %v721, 7
    %v723 = vsub.s32 0, %v722
    %v724 = vrot.slane %v719, %v723
    %v725 = vlaneseq
    %v726 = vshrl.u32 %v725, 7
    %v727 = vsub.s32 1, %v726
    %v728 = vrot.slane %v719, %v727
    %v729 = vlaneseq
    %v730 = vshrl.u32 %v729, 7
    %v731 = vsub.s32 2, %v730
    %v732 = vrot.slane %v719, %v731
    %v864 = vunpack.c.l.b16 %v591
    %v865 = vunpack.c.h.b16 %v591
    %v866 = vunpack.c.l.b16 %v592
    %v867 = vunpack.c.l.b16 %v593
    %v868 = vunpack.c.h.b16 %v593
    %v869 = vunpack.c.l.b16 %v594
    %v870 = vunpack.c.l.b16 %v595
    %v871 = vunpack.c.h.b16 %v595
    %v872 = vunpack.c.l.b16 %v596
    %v873 = vunpack.c.l.b16 %v597
    %v874 = vunpack.c.h.b16 %v597
    %v875 = vunpack.c.l.b16 %v598
    %v876 = vunpack.c.l.b16 %v599
    %v877 = vunpack.c.h.b16 %v599
    %v878 = vunpack.c.l.b16 %v600
    %v879 = vunpack.c.l.b16 %v601
    %v880 = vunpack.c.h.b16 %v601
    %v881 = vunpack.c.l.b16 %v602
    %v882 = vunpack.c.l.b16 %v603
    %v883 = vunpack.c.h.b16 %v603
    %v884 = vunpack.c.l.b16 %v604
    %v885 = vunpack.c.l.b16 %v605
    %v886 = vunpack.c.h.b16 %v605
    %v887 = vunpack.c.l.b16 %v606
    %v888 = vunpack.c.l.b16 %v607
    %v889 = vunpack.c.h.b16 %v607
    %v890 = vunpack.c.l.b16 %v608
    %v891 = vunpack.c.l.b16 %v609
    %v892 = vunpack.c.h.b16 %v609
    %v893 = vunpack.c.l.b16 %v610
    %v894 = vunpack.c.l.b16 %v611
    %v895 = vunpack.c.h.b16 %v611
    %v896 = vunpack.c.l.b16 %v612
    %v897 = vunpack.c.l.b16 %v613
    %v898 = vunpack.c.h.b16 %v613
    %v899 = vunpack.c.l.b16 %v614
    %v900 = vunpack.c.l.b16 %v615
    %v901 = vunpack.c.h.b16 %v615
    %v902 = vunpack.c.l.b16 %v616
    %v903 = vunpack.c.l.b16 %v617
    %v904 = vunpack.c.h.b16 %v617
    %v905 = vunpack.c.l.b16 %v618
    %v906 = vunpack.c.l.b16 %v619
    %v907 = vunpack.c.h.b16 %v619
    %v908 = vunpack.c.l.b16 %v620
    %v909 = vunpack.c.l.b16 %v621
    %v910 = vunpack.c.h.b16 %v621
    %v911 = vunpack.c.l.b16 %v622
    %v912 = vunpack.c.l.b16 %v623
    %v913 = vunpack.c.h.b16 %v623
    %v914 = vunpack.c.l.b16 %v624
    %v915 = vunpack.c.l.b16 %v625
    %v916 = vunpack.c.h.b16 %v625
    %v917 = vunpack.c.l.b16 %v626
    %v918 = vunpack.c.l.b16 %v627
    %v919 = vunpack.c.h.b16 %v627
    %v920 = vunpack.c.l.b16 %v628
    %v921 = vunpack.c.l.b16 %v629
    %v922 = vunpack.c.h.b16 %v629
    %v923 = vunpack.c.l.b16 %v630
    %v924 = vunpack.c.l.b16 %v631
    %v925 = vunpack.c.h.b16 %v631
    %v926 = vunpack.c.l.b16 %v632
    %v927 = vunpack.c.l.b16 %v633
    %v928 = vunpack.c.h.b16 %v633
    %v929 = vunpack.c.l.b16 %v634
    %v930 = vunpack.c.l.b16 %v635
    %v931 = vunpack.c.h.b16 %v635
    %v932 = vunpack.c.l.b16 %v636
    %v933 = vunpack.c.l.b16 %v637
    %v934 = vunpack.c.h.b16 %v637
    %v935 = vunpack.c.l.b16 %v638
    %v936 = vunpack.c.l.b16 %v639
    %v937 = vunpack.c.h.b16 %v639
    %v938 = vunpack.c.l.b16 %v640
    %v939 = vunpack.c.l.b16 %v641
    %v940 = vunpack.c.h.b16 %v641
    %v941 = vunpack.c.l.b16 %v642
    %v942 = vunpack.c.l.b16 %v643
    %v943 = vunpack.c.h.b16 %v643
    %v944 = vunpack.c.l.b16 %v644
    %v945 = vunpack.c.l.b16 %v645
    %v946 = vunpack.c.h.b16 %v645
    %v947 = vunpack.c.l.b16 %v646
    %v948 = vunpack.c.l.b16 %v647
    %v949 = vunpack.c.h.b16 %v647
    %v950 = vunpack.c.l.b16 %v648
    %v951 = vunpack.c.l.b16 %v649
    %v952 = vunpack.c.h.b16 %v649
    %v953 = vunpack.c.l.b16 %v650
    %v954 = vunpack.c.l.b16 %v651
    %v955 = vunpack.c.h.b16 %v651
    %v956 = vunpack.c.l.b16 %v652
    %v957 = vunpack.c.l.b16 %v653
    %v958 = vunpack.c.h.b16 %v653
    %v959 = vunpack.c.l.b16 %v654
    %v960 = vunpack.c.l.b16 %v655
    %v961 = vunpack.c.h.b16 %v655
    %v962 = vunpack.c.l.b16 %v656
    %v963 = vunpack.c.l.b16 %v657
    %v964 = vunpack.c.h.b16 %v657
    %v965 = vunpack.c.l.b16 %v658
    %v966 = vunpack.c.l.b16 %v659
    %v967 = vunpack.c.h.b16 %v659
    %v968 = vunpack.c.l.b16 %v660
    %v969 = vunpack.c.l.b16 %v661
    %v970 = vunpack.c.h.b16 %v661
    %v971 = vunpack.c.l.b16 %v662
    %v972 = vunpack.c.l.b16 %v663
    %v973 = vunpack.c.h.b16 %v663
    %v974 = vunpack.c.l.b16 %v664
    %v975 = vunpack.c.l.b16 %v665
    %v976 = vunpack.c.h.b16 %v665
    %v977 = vunpack.c.l.b16 %v666
    %v978 = vunpack.c.l.b16 %v667
    %v979 = vunpack.c.h.b16 %v667
    %v980 = vunpack.c.l.b16 %v668
    %v981 = vunpack.c.l.b16 %v669
    %v982 = vunpack.c.h.b16 %v669
    %v983 = vunpack.c.l.b16 %v670
    %v984 = vunpack.c.l.b16 %v671
    %v985 = vunpack.c.h.b16 %v671
    %v986 = vunpack.c.l.b16 %v672
    %v987 = vunpack.c.l.b16 %v673
    %v988 = vunpack.c.h.b16 %v673
    %v989 = vunpack.c.l.b16 %v674
    %v990 = vunpack.c.l.b16 %v675
    %v991 = vunpack.c.h.b16 %v675
    %v992 = vunpack.c.l.b16 %v676
    %v993 = vunpack.c.l.b16 %v677
    %v994 = vunpack.c.h.b16 %v677
    %v995 = vunpack.c.l.b16 %v678
    %v996 = vunpack.c.l.b16 %v679
    %v997 = vunpack.c.h.b16 %v679
    %v998 = vunpack.c.l.b16 %v680
    %v999 = vunpack.c.l.b16 %v681
    %v1000 = vunpack.c.h.b16 %v681
    %v1001 = vunpack.c.l.b16 %v682
    %v1002 = vunpack.c.l.b16 %v683
    %v1003 = vunpack.c.h.b16 %v683
    %v1004 = vunpack.c.l.b16 %v684
    %v1005 = vunpack.c.l.b16 %v685
    %v1006 = vunpack.c.h.b16 %v685
    %v1007 = vunpack.c.l.b16 %v686
    %v1008 = vunpack.c.l.b16 %v687
    %v1009 = vunpack.c.h.b16 %v687
    %v1010 = vunpack.c.l.b16 %v688
    %v1011 = vunpack.c.l.b16 %v689
    %v1012 = vunpack.c.h.b16 %v689
    %v1013 = vunpack.c.l.b16 %v690
    %v1014 = vunpack.c.l.b16 %v691
    %v1015 = vunpack.c.h.b16 %v691
    %v1016 = vunpack.c.l.b16 %v692
    %v1017 = vunpack.c.l.b16 %v693
    %v1018 = vunpack.c.h.b16 %v693
    %v1019 = vunpack.c.l.b16 %v694
    %v1020 = vunpack.c.l.b16 %v695
    %v1021 = vunpack.c.h.b16 %v695
    %v1022 = vunpack.c.l.b16 %v696
    %v1023 = vunpack.c.l.b16 %v697
    %v1024 = vunpack.c.h.b16 %v697
    %v1025 = vunpack.c.l.b16 %v698
    %v1026 = vunpack.c.l.b16 %v699
    %v1027 = vunpack.c.h.b16 %v699
    %v1028 = vunpack.c.l.b16 %v700
    %v1029 = vunpack.c.l.b16 %v701
    %v1030 = vunpack.c.h.b16 %v701
    %v1031 = vunpack.c.l.b16 %v702
    %v1032 = vunpack.c.l.b16 %v703
    %v1033 = vunpack.c.h.b16 %v703
    %v1034 = vunpack.c.l.b16 %v704
    %v1035 = vunpack.c.l.b16 %v705
    %v1036 = vunpack.c.h.b16 %v705
    %v1037 = vunpack.c.l.b16 %v706
    %v1038 = vunpack.c.l.b16 %v707
    %v1039 = vunpack.c.h.b16 %v707
    %v1040 = vunpack.c.l.b16 %v708
    %v1041 = vunpack.c.l.b16 %v709
    %v1042 = vunpack.c.h.b16 %v709
    %v1043 = vunpack.c.l.b16 %v710
    %v1044 = vunpack.c.l.b16 %v711
    %v1045 = vunpack.c.h.b16 %v711
    %v1046 = vunpack.c.l.b16 %v712
    %v1047 = vunpack.c.l.b16 %v713
    %v1048 = vunpack.c.h.b16 %v713
    %v1049 = vunpack.c.l.b16 %v714
    %v1050 = vunpack.c.l.b16 %v715
    %v1051 = vunpack.c.h.b16 %v715
    %v1052 = vunpack.c.l.b16 %v716
    %v1053 = vunpack.c.l.b16 %v717
    %v1054 = vunpack.c.h.b16 %v717
    %v1055 = vunpack.c.l.b16 %v718
    %v1056 = vpack.c.b16 %v867, %v864
    %v1057 = vpack.c.b16 %v868, %v865
    %v1058 = vpack.c.b16 %v869, %v866
    %v1059 = vpack.c.b16 %v873, %v870
    %v1060 = vpack.c.b16 %v874, %v871
    %v1061 = vpack.c.b16 %v875, %v872
    %v1062 = vpack.c.b16 %v879, %v876
    %v1063 = vpack.c.b16 %v880, %v877
    %v1064 = vpack.c.b16 %v881, %v878
    %v1065 = vpack.c.b16 %v885, %v882
    %v1066 = vpack.c.b16 %v886, %v883
    %v1067 = vpack.c.b16 %v887, %v884
    %v1068 = vpack.c.b16 %v891, %v888
    %v1069 = vpack.c.b16 %v892, %v889
    %v1070 = vpack.c.b16 %v893, %v890
    %v1071 = vpack.c.b16 %v897, %v894
    %v1072 = vpack.c.b16 %v898, %v895
    %v1073 = vpack.c.b16 %v899, %v896
    %v1074 = vpack.c.b16 %v903, %v900
    %v1075 = vpack.c.b16 %v904, %v901
    %v1076 = vpack.c.b16 %v905, %v902
    %v1077 = vpack.c.b16 %v909, %v906
    %v1078 = vpack.c.b16 %v910, %v907
    %v1079 = vpack.c.b16 %v911, %v908
    %v1080 = vpack.c.b16 %v915, %v912
    %v1081 = vpack.c.b16 %v916, %v913
    %v1082 = vpack.c.b16 %v917, %v914
    %v1083 = vpack.c.b16 %v921, %v918
    %v1084 = vpack.c.b16 %v922, %v919
    %v1085 = vpack.c.b16 %v923, %v920
    %v1086 = vpack.c.b16 %v927, %v924
    %v1087 = vpack.c.b16 %v928, %v925
    %v1088 = vpack.c.b16 %v929, %v926
    %v1089 = vpack.c.b16 %v933, %v930
    %v1090 = vpack.c.b16 %v934, %v931
    %v1091 = vpack.c.b16 %v935, %v932
    %v1092 = vpack.c.b16 %v939, %v936
    %v1093 = vpack.c.b16 %v940, %v937
    %v1094 = vpack.c.b16 %v941, %v938
    %v1095 = vpack.c.b16 %v945, %v942
    %v1096 = vpack.c.b16 %v946, %v943
    %v1097 = vpack.c.b16 %v947, %v944
    %v1098 = vpack.c.b16 %v951, %v948
    %v1099 = vpack.c.b16 %v952, %v949
    %v1100 = vpack.c.b16 %v953, %v950
    %v1101 = vpack.c.b16 %v957, %v954
    %v1102 = vpack.c.b16 %v958, %v955
    %v1103 = vpack.c.b16 %v959, %v956
    %v1104 = vpack.c.b16 %v963, %v960
    %v1105 = vpack.c.b16 %v964, %v961
    %v1106 = vpack.c.b16 %v965, %v962
    %v1107 = vpack.c.b16 %v969, %v966
    %v1108 = vpack.c.b16 %v970, %v967
    %v1109 = vpack.c.b16 %v971, %v968
    %v1110 = vpack.c.b16 %v975, %v972
    %v1111 = vpack.c.b16 %v976, %v973
    %v1112 = vpack.c.b16 %v977, %v974
    %v1113 = vpack.c.b16 %v981, %v978
    %v1114 = vpack.c.b16 %v982, %v979
    %v1115 = vpack.c.b16 %v983, %v980
    %v1116 = vpack.c.b16 %v987, %v984
    %v1117 = vpack.c.b16 %v988, %v985
    %v1118 = vpack.c.b16 %v989, %v986
    %v1119 = vpack.c.b16 %v993, %v990
    %v1120 = vpack.c.b16 %v994, %v991
    %v1121 = vpack.c.b16 %v995, %v992
    %v1122 = vpack.c.b16 %v999, %v996
    %v1123 = vpack.c.b16 %v1000, %v997
    %v1124 = vpack.c.b16 %v1001, %v998
    %v1125 = vpack.c.b16 %v1005, %v1002
    %v1126 = vpack.c.b16 %v1006, %v1003
    %v1127 = vpack.c.b16 %v1007, %v1004
    %v1128 = vpack.c.b16 %v1011, %v1008
    %v1129 = vpack.c.b16 %v1012, %v1009
    %v1130 = vpack.c.b16 %v1013, %v1010
    %v1131 = vpack.c.b16 %v1017, %v1014
    %v1132 = vpack.c.b16 %v1018, %v1015
    %v1133 = vpack.c.b16 %v1019, %v1016
    %v1134 = vpack.c.b16 %v1023, %v1020
    %v1135 = vpack.c.b16 %v1024, %v1021
    %v1136 = vpack.c.b16 %v1025, %v1022
    %v1137 = vpack.c.b16 %v1029, %v1026
    %v1138 = vpack.c.b16 %v1030, %v1027
    %v1139 = vpack.c.b16 %v1031, %v1028
    %v1140 = vpack.c.b16 %v1035, %v1032
    %v1141 = vpack.c.b16 %v1036, %v1033
    %v1142 = vpack.c.b16 %v1037, %v1034
    %v1143 = vpack.c.b16 %v1041, %v1038
    %v1144 = vpack.c.b16 %v1042, %v1039
    %v1145 = vpack.c.b16 %v1043, %v1040
    %v1146 = vpack.c.b16 %v1047, %v1044
    %v1147 = vpack.c.b16 %v1048, %v1045
    %v1148 = vpack.c.b16 %v1049, %v1046
    %v1149 = vpack.c.b16 %v1053, %v1050
    %v1150 = vpack.c.b16 %v1054, %v1051
    %v1151 = vpack.c.b16 %v1055, %v1052
    %1248 = vmatprep.subr.bf16.mxu0 %v1057
    %1249 = vmatpush1.bf16.msra.mxu0 %v1056
    %1250 = vmatprep.subr.bf16.mxu0 %v1060
    %1251 = vmatpush1.bf16.msra.mxu0 %v1059
    %1252 = vmatprep.subr.bf16.mxu0 %v1063
    %1253 = vmatpush1.bf16.msra.mxu0 %v1062
    %1254 = vmatprep.subr.bf16.mxu0 %v1066
    %1255 = vmatpush1.bf16.msra.mxu0 %v1065
    %1256 = vmatprep.subr.bf16.mxu0 %v1069
    %1257 = vmatpush1.bf16.msra.mxu0 %v1068
    %1258 = vmatprep.subr.bf16.mxu0 %v1072
    %1259 = vmatpush1.bf16.msra.mxu0 %v1071
    %1260 = vmatprep.subr.bf16.mxu0 %v1075
    %1261 = vmatpush1.bf16.msra.mxu0 %v1074
    %1262 = vmatprep.subr.bf16.mxu0 %v1078
    %1263 = vmatpush1.bf16.msra.mxu0 %v1077
    %1264 = vmatprep.subr.bf16.mxu0 %v1081
    %1265 = vmatpush1.bf16.msra.mxu0 %v1080
    %1266 = vmatprep.subr.bf16.mxu0 %v1084
    %1267 = vmatpush1.bf16.msra.mxu0 %v1083
    %1268 = vmatprep.subr.bf16.mxu0 %v1087
    %1269 = vmatpush1.bf16.msra.mxu0 %v1086
    %1270 = vmatprep.subr.bf16.mxu0 %v1090
    %1271 = vmatpush1.bf16.msra.mxu0 %v1089
    %1272 = vmatprep.subr.bf16.mxu0 %v1093
    %1273 = vmatpush1.bf16.msra.mxu0 %v1092
    %1274 = vmatprep.subr.bf16.mxu0 %v1096
    %1275 = vmatpush1.bf16.msra.mxu0 %v1095
    %1276 = vmatprep.subr.bf16.mxu0 %v1099
    %1277 = vmatpush1.bf16.msra.mxu0 %v1098
    %1278 = vmatprep.subr.bf16.mxu0 %v1102
    %1279 = vmatpush1.bf16.msra.mxu0 %v1101
    %1280 = vmatprep.mubr.bf16.mxu0 %v588
    %1281 = vmatmul.mubr.bf16.gmra.mrb[0].mxu0 %v587
    %v1282 = vpop.f32.mrb[0].mxu0
    %v1283 = vadd.f32 %v724, %v1282
    %v1284 = vpop.f32.mrb[0].mxu0
    %v1285 = vadd.f32 %v728, %v1284
    %v1286 = vpop.f32.mrb[0].mxu0
    %v1287 = vpop.f32.mrb[0].mxu0
    %1288 = vdwg.mxu0
    %1289 = vmatprep.subr.bf16.mxu0 %v1105
    %1290 = vmatpush1.bf16.msra.mxu0 %v1104
    %1291 = vmatprep.subr.bf16.mxu0 %v1108
    %1292 = vmatpush1.bf16.msra.mxu0 %v1107
    %1293 = vmatprep.subr.bf16.mxu0 %v1111
    %1294 = vmatpush1.bf16.msra.mxu0 %v1110
    %1295 = vmatprep.subr.bf16.mxu0 %v1114
    %1296 = vmatpush1.bf16.msra.mxu0 %v1113
    %1297 = vmatprep.subr.bf16.mxu0 %v1117
    %1298 = vmatpush1.bf16.msra.mxu0 %v1116
    %1299 = vmatprep.subr.bf16.mxu0 %v1120
    %1300 = vmatpush1.bf16.msra.mxu0 %v1119
    %1301 = vmatprep.subr.bf16.mxu0 %v1123
    %1302 = vmatpush1.bf16.msra.mxu0 %v1122
    %1303 = vmatprep.subr.bf16.mxu0 %v1126
    %1304 = vmatpush1.bf16.msra.mxu0 %v1125
    %1305 = vmatprep.subr.bf16.mxu0 %v1129
    %1306 = vmatpush1.bf16.msra.mxu0 %v1128
    %1307 = vmatprep.subr.bf16.mxu0 %v1132
    %1308 = vmatpush1.bf16.msra.mxu0 %v1131
    %1309 = vmatprep.subr.bf16.mxu0 %v1135
    %1310 = vmatpush1.bf16.msra.mxu0 %v1134
    %1311 = vmatprep.subr.bf16.mxu0 %v1138
    %1312 = vmatpush1.bf16.msra.mxu0 %v1137
    %1313 = vmatprep.subr.bf16.mxu0 %v1141
    %1314 = vmatpush1.bf16.msra.mxu0 %v1140
    %1315 = vmatprep.subr.bf16.mxu0 %v1144
    %1316 = vmatpush1.bf16.msra.mxu0 %v1143
    %1317 = vmatprep.subr.bf16.mxu0 %v1147
    %1318 = vmatpush1.bf16.msra.mxu0 %v1146
    %1319 = vmatprep.subr.bf16.mxu0 %v1150
    %1320 = vmatpush1.bf16.msra.mxu0 %v1149
    %1321 = vmatprep.mubr.bf16.mxu0 %v590
    %1322 = vmatmul.mubr.bf16.gmra.mrb[0].mxu0 %v589
    %v1323 = vpop.f32.mrb[0].mxu0
    %v1324 = vadd.f32 %v1283, %v1323
    %v1325 = vpop.f32.mrb[0].mxu0
    %v1326 = vadd.f32 %v1285, %v1325
    %v1327 = vpop.f32.mrb[0].mxu0
    %v1328 = vpop.f32.mrb[0].mxu0
    %1329 = vdwg.mxu0
    %1330 = vmatprep.subr.bf16.mxu0 0
    %1331 = vmatpush1.bf16.msra.mxu0 %v1058
    %1332 = vmatprep.subr.bf16.mxu0 0
    %1333 = vmatpush1.bf16.msra.mxu0 %v1061
    %1334 = vmatprep.subr.bf16.mxu0 0
    %1335 = vmatpush1.bf16.msra.mxu0 %v1064
    %1336 = vmatprep.subr.bf16.mxu0 0
    %1337 = vmatpush1.bf16.msra.mxu0 %v1067
    %1338 = vmatprep.subr.bf16.mxu0 0
    %1339 = vmatpush1.bf16.msra.mxu0 %v1070
    %1340 = vmatprep.subr.bf16.mxu0 0
    %1341 = vmatpush1.bf16.msra.mxu0 %v1073
    %1342 = vmatprep.subr.bf16.mxu0 0
    %1343 = vmatpush1.bf16.msra.mxu0 %v1076
    %1344 = vmatprep.subr.bf16.mxu0 0
    %1345 = vmatpush1.bf16.msra.mxu0 %v1079
    %1346 = vmatprep.subr.bf16.mxu0 0
    %1347 = vmatpush1.bf16.msra.mxu0 %v1082
    %1348 = vmatprep.subr.bf16.mxu0 0
    %1349 = vmatpush1.bf16.msra.mxu0 %v1085
    %1350 = vmatprep.subr.bf16.mxu0 0
    %1351 = vmatpush1.bf16.msra.mxu0 %v1088
    %1352 = vmatprep.subr.bf16.mxu0 0
    %1353 = vmatpush1.bf16.msra.mxu0 %v1091
    %1354 = vmatprep.subr.bf16.mxu0 0
    %1355 = vmatpush1.bf16.msra.mxu0 %v1094
    %1356 = vmatprep.subr.bf16.mxu0 0
    %1357 = vmatpush1.bf16.msra.mxu0 %v1097
    %1358 = vmatprep.subr.bf16.mxu0 0
    %1359 = vmatpush1.bf16.msra.mxu0 %v1100
    %1360 = vmatprep.subr.bf16.mxu0 0
    %1361 = vmatpush1.bf16.msra.mxu0 %v1103
    %1362 = vmatprep.mubr.bf16.mxu0 %v588
    %1363 = vmatmul.mubr.bf16.gmra.mrb[0].mxu0 %v587
    %v1364 = vpop.f32.mrb[0].mxu0
    %v1365 = vadd.f32 %v732, %v1364
    %v1366 = vpop.f32.mrb[0].mxu0
    %v1367 = vpop.f32.mrb[0].mxu0
    %v1368 = vpop.f32.mrb[0].mxu0
    %1369 = vdwg.mxu0
    %1370 = vmatprep.subr.bf16.mxu0 0
    %1371 = vmatpush1.bf16.msra.mxu0 %v1106
    %1372 = vmatprep.subr.bf16.mxu0 0
    %1373 = vmatpush1.bf16.msra.mxu0 %v1109
    %1374 = vmatprep.subr.bf16.mxu0 0
    %1375 = vmatpush1.bf16.msra.mxu0 %v1112
    %1376 = vmatprep.subr.bf16.mxu0 0
    %1377 = vmatpush1.bf16.msra.mxu0 %v1115
    %1378 = vmatprep.subr.bf16.mxu0 0
    %1379 = vmatpush1.bf16.msra.mxu0 %v1118
    %1380 = vmatprep.subr.bf16.mxu0 0
    %1381 = vmatpush1.bf16.msra.mxu0 %v1121
    %1382 = vmatprep.subr.bf16.mxu0 0
    %1383 = vmatpush1.bf16.msra.mxu0 %v1124
    %1384 = vmatprep.subr.bf16.mxu0 0
    %1385 = vmatpush1.bf16.msra.mxu0 %v1127
    %1386 = vmatprep.subr.bf16.mxu0 0
    %1387 = vmatpush1.bf16.msra.mxu0 %v1130
    %1388 = vmatprep.subr.bf16.mxu0 0
    %1389 = vmatpush1.bf16.msra.mxu0 %v1133
    %1390 = vmatprep.subr.bf16.mxu0 0
    %1391 = vmatpush1.bf16.msra.mxu0 %v1136
    %1392 = vmatprep.subr.bf16.mxu0 0
    %1393 = vmatpush1.bf16.msra.mxu0 %v1139
    %1394 = vmatprep.subr.bf16.mxu0 0
    %1395 = vmatpush1.bf16.msra.mxu0 %v1142
    %1396 = vmatprep.subr.bf16.mxu0 0
    %1397 = vmatpush1.bf16.msra.mxu0 %v1145
    %1398 = vmatprep.subr.bf16.mxu0 0
    %1399 = vmatpush1.bf16.msra.mxu0 %v1148
    %1400 = vmatprep.subr.bf16.mxu0 0
    %1401 = vmatpush1.bf16.msra.mxu0 %v1151
    %1402 = vmatprep.mubr.bf16.mxu0 %v590
    %1403 = vmatmul.mubr.bf16.gmra.mrb[0].mxu0 %v589
    %v1404 = vpop.f32.mrb[0].mxu0
    %v1405 = vadd.f32 %v1365, %v1404
    %v1406 = vpop.f32.mrb[0].mxu0
    %v1407 = vpop.f32.mrb[0].mxu0
    %v1408 = vpop.f32.mrb[0].mxu0
    %1409 = vdwg.mxu0
    %v1410 = vmax.f32 %v1324, 0.0
    %v1411 = vmax.f32 %v1326, 0.0
    %v1412 = vmax.f32 %v1405, 0.0
    %v1413 = vpack.c.bf16 %v1410, %v1410
    %v1414 = vpack.c.bf16 %v1411, %v1411
    %v1415 = vpack.c.bf16 %v1412, %v1412
    %v1416 = vld [vmem:[#allocation8] sm:$0xf]
    %v1417 = vld [vmem:[#allocation8 + $0x4] sm:$0xf]
    %v1418 = vld [vmem:[#allocation8 + $0x8] sm:$0xf]
    %v1419 = vld [vmem:[#allocation8 + $0xc] sm:$0xf]
    %v1420 = vld [vmem:[#allocation8 + $0x10] sm:$0xf]
    %v1421 = vld [vmem:[#allocation8 + $0x14] sm:$0xf]
    %v1422 = vld [vmem:[#allocation8 + $0x18] sm:$0xf]
    %v1423 = vld [vmem:[#allocation8 + $0x1c] sm:$0xf]
    %v1424 = vld [vmem:[#allocation8 + $0x20] sm:$0xf]
    %v1425 = vld [vmem:[#allocation8 + $0x24] sm:$0xf]
    %v1426 = vld [vmem:[#allocation8 + $0x28] sm:$0xf]
    %v1427 = vld [vmem:[#allocation8 + $0x2c] sm:$0xf]
    %v1428 = vld [vmem:[#allocation8 + $0x30] sm:$0xf]
    %v1429 = vld [vmem:[#allocation8 + $0x34] sm:$0xf]
    %v1430 = vld [vmem:[#allocation8 + $0x38] sm:$0xf]
    %v1431 = vld [vmem:[#allocation8 + $0x3c] sm:$0xf]
    %v1432 = vld [vmem:[#allocation8 + $0x40] sm:$0xf]
    %v1433 = vld [vmem:[#allocation8 + $0x44] sm:$0xf]
    %v1434 = vld [vmem:[#allocation8 + $0x48] sm:$0xf]
    %v1435 = vld [vmem:[#allocation8 + $0x4c] sm:$0xf]
    %v1436 = vld [vmem:[#allocation8 + $0x50] sm:$0xf]
    %v1437 = vld [vmem:[#allocation8 + $0x54] sm:$0xf]
    %v1438 = vld [vmem:[#allocation8 + $0x58] sm:$0xf]
    %v1439 = vld [vmem:[#allocation8 + $0x5c] sm:$0xf]
    %v1440 = vld [vmem:[#allocation8 + $0x60] sm:$0xf]
    %v1441 = vld [vmem:[#allocation8 + $0x64] sm:$0xf]
    %v1442 = vld [vmem:[#allocation8 + $0x68] sm:$0xf]
    %v1443 = vld [vmem:[#allocation8 + $0x6c] sm:$0xf]
    %v1444 = vld [vmem:[#allocation8 + $0x70] sm:$0xf]
    %v1445 = vld [vmem:[#allocation8 + $0x74] sm:$0xf]
    %v1446 = vld [vmem:[#allocation8 + $0x78] sm:$0xf]
    %v1447 = vld [vmem:[#allocation8 + $0x7c] sm:$0xf]
    %v1448 = vld [vmem:[#allocation8 + $0x80] sm:$0xf]
    %v1449 = vld [vmem:[#allocation8 + $0x84] sm:$0xf]
    %v1450 = vld [vmem:[#allocation8 + $0x88] sm:$0xf]
    %v1451 = vld [vmem:[#allocation8 + $0x8c] sm:$0xf]
    %v1452 = vld [vmem:[#allocation8 + $0x90] sm:$0xf]
    %v1453 = vld [vmem:[#allocation8 + $0x94] sm:$0xf]
    %v1454 = vld [vmem:[#allocation8 + $0x98] sm:$0xf]
    %v1455 = vld [vmem:[#allocation8 + $0x9c] sm:$0xf]
    %v1456 = vld [vmem:[#allocation8 + $0xa0] sm:$0xf]
    %v1457 = vld [vmem:[#allocation8 + $0xa4] sm:$0xf]
    %v1458 = vld [vmem:[#allocation8 + $0xa8] sm:$0xf]
    %v1459 = vld [vmem:[#allocation8 + $0xac] sm:$0xf]
    %v1460 = vld [vmem:[#allocation8 + $0xb0] sm:$0xf]
    %v1461 = vld [vmem:[#allocation8 + $0xb4] sm:$0xf]
    %v1462 = vld [vmem:[#allocation8 + $0xb8] sm:$0xf]
    %v1463 = vld [vmem:[#allocation8 + $0xbc] sm:$0xf]
    %v1464 = vld [vmem:[%s6] sm:$0x1]
    %v1466 = vlaneseq
    %v1467 = vshrl.u32 %v1466, 7
    %v1468 = vsub.s32 0, %v1467
    %v1469 = vrot.slane %v1464, %v1468
    %v1519 = vunpack.c.l.b16 %v1416
    %v1520 = vunpack.c.l.b16 %v1417
    %v1521 = vunpack.c.l.b16 %v1418
    %v1522 = vunpack.c.l.b16 %v1419
    %v1523 = vunpack.c.l.b16 %v1420
    %v1524 = vunpack.c.l.b16 %v1421
    %v1525 = vunpack.c.l.b16 %v1422
    %v1526 = vunpack.c.l.b16 %v1423
    %v1527 = vunpack.c.l.b16 %v1424
    %v1528 = vunpack.c.l.b16 %v1425
    %v1529 = vunpack.c.l.b16 %v1426
    %v1530 = vunpack.c.l.b16 %v1427
    %v1531 = vunpack.c.l.b16 %v1428
    %v1532 = vunpack.c.l.b16 %v1429
    %v1533 = vunpack.c.l.b16 %v1430
    %v1534 = vunpack.c.l.b16 %v1431
    %v1535 = vunpack.c.l.b16 %v1432
    %v1536 = vunpack.c.l.b16 %v1433
    %v1537 = vunpack.c.l.b16 %v1434
    %v1538 = vunpack.c.l.b16 %v1435
    %v1539 = vunpack.c.l.b16 %v1436
    %v1540 = vunpack.c.l.b16 %v1437
    %v1541 = vunpack.c.l.b16 %v1438
    %v1542 = vunpack.c.l.b16 %v1439
    %v1543 = vunpack.c.l.b16 %v1440
    %v1544 = vunpack.c.l.b16 %v1441
    %v1545 = vunpack.c.l.b16 %v1442
    %v1546 = vunpack.c.l.b16 %v1443
    %v1547 = vunpack.c.l.b16 %v1444
    %v1548 = vunpack.c.l.b16 %v1445
    %v1549 = vunpack.c.l.b16 %v1446
    %v1550 = vunpack.c.l.b16 %v1447
    %v1551 = vunpack.c.l.b16 %v1448
    %v1552 = vunpack.c.l.b16 %v1449
    %v1553 = vunpack.c.l.b16 %v1450
    %v1554 = vunpack.c.l.b16 %v1451
    %v1555 = vunpack.c.l.b16 %v1452
    %v1556 = vunpack.c.l.b16 %v1453
    %v1557 = vunpack.c.l.b16 %v1454
    %v1558 = vunpack.c.l.b16 %v1455
    %v1559 = vunpack.c.l.b16 %v1456
    %v1560 = vunpack.c.l.b16 %v1457
    %v1561 = vunpack.c.l.b16 %v1458
    %v1562 = vunpack.c.l.b16 %v1459
    %v1563 = vunpack.c.l.b16 %v1460
    %v1564 = vunpack.c.l.b16 %v1461
    %v1565 = vunpack.c.l.b16 %v1462
    %v1566 = vunpack.c.l.b16 %v1463
    %v1567 = vpack.c.b16 %v1520, %v1519
    %v1568 = vpack.c.b16 %v1522, %v1521
    %v1569 = vpack.c.b16 %v1524, %v1523
    %v1570 = vpack.c.b16 %v1526, %v1525
    %v1571 = vpack.c.b16 %v1528, %v1527
    %v1572 = vpack.c.b16 %v1530, %v1529
    %v1573 = vpack.c.b16 %v1532, %v1531
    %v1574 = vpack.c.b16 %v1534, %v1533
    %v1575 = vpack.c.b16 %v1536, %v1535
    %v1576 = vpack.c.b16 %v1538, %v1537
    %v1577 = vpack.c.b16 %v1540, %v1539
    %v1578 = vpack.c.b16 %v1542, %v1541
    %v1579 = vpack.c.b16 %v1544, %v1543
    %v1580 = vpack.c.b16 %v1546, %v1545
    %v1581 = vpack.c.b16 %v1548, %v1547
    %v1582 = vpack.c.b16 %v1550, %v1549
    %v1583 = vpack.c.b16 %v1552, %v1551
    %v1584 = vpack.c.b16 %v1554, %v1553
    %v1585 = vpack.c.b16 %v1556, %v1555
    %v1586 = vpack.c.b16 %v1558, %v1557
    %v1587 = vpack.c.b16 %v1560, %v1559
    %v1588 = vpack.c.b16 %v1562, %v1561
    %v1589 = vpack.c.b16 %v1564, %v1563
    %v1590 = vpack.c.b16 %v1566, %v1565
    %1615 = vmatprep.subr.bf16.mxu0 0
    %1616 = vmatpush1.bf16.msra.mxu0 %v1567
    %1617 = vmatprep.subr.bf16.mxu0 0
    %1618 = vmatpush1.bf16.msra.mxu0 %v1568
    %1619 = vmatprep.subr.bf16.mxu0 0
    %1620 = vmatpush1.bf16.msra.mxu0 %v1569
    %1621 = vmatprep.subr.bf16.mxu0 0
    %1622 = vmatpush1.bf16.msra.mxu0 %v1570
    %1623 = vmatprep.subr.bf16.mxu0 0
    %1624 = vmatpush1.bf16.msra.mxu0 %v1571
    %1625 = vmatprep.subr.bf16.mxu0 0
    %1626 = vmatpush1.bf16.msra.mxu0 %v1572
    %1627 = vmatprep.subr.bf16.mxu0 0
    %1628 = vmatpush1.bf16.msra.mxu0 %v1573
    %1629 = vmatprep.subr.bf16.mxu0 0
    %1630 = vmatpush1.bf16.msra.mxu0 %v1574
    %1631 = vmatprep.subr.bf16.mxu0 0
    %1632 = vmatpush1.bf16.msra.mxu0 %v1575
    %1633 = vmatprep.subr.bf16.mxu0 0
    %1634 = vmatpush1.bf16.msra.mxu0 %v1576
    %1635 = vmatprep.subr.bf16.mxu0 0
    %1636 = vmatpush1.bf16.msra.mxu0 %v1577
    %1637 = vmatprep.subr.bf16.mxu0 0
    %1638 = vmatpush1.bf16.msra.mxu0 %v1578
    %1639 = vmatprep.subr.bf16.mxu0 0
    %1640 = vmatpush1.bf16.msra.mxu0 %v1579
    %1641 = vmatprep.subr.bf16.mxu0 0
    %1642 = vmatpush1.bf16.msra.mxu0 %v1580
    %1643 = vmatprep.subr.bf16.mxu0 0
    %1644 = vmatpush1.bf16.msra.mxu0 %v1581
    %1645 = vmatprep.subr.bf16.mxu0 0
    %1646 = vmatpush1.bf16.msra.mxu0 %v1582
    %1647 = vmatprep.mubr.bf16.mxu0 %v1414
    %1648 = vmatmul.mubr.bf16.gmra.mrb[0].mxu0 %v1413
    %v1649 = vpop.f32.mrb[0].mxu0
    %v1650 = vadd.f32 %v1469, %v1649
    %v1651 = vpop.f32.mrb[0].mxu0
    %v1652 = vpop.f32.mrb[0].mxu0
    %v1653 = vpop.f32.mrb[0].mxu0
    %1654 = vdwg.mxu0
    %1655 = vmatprep.subr.bf16.mxu0 0
    %1656 = vmatpush1.bf16.msra.mxu0 %v1583
    %1657 = vmatprep.subr.bf16.mxu0 0
    %1658 = vmatpush1.bf16.msra.mxu0 %v1584
    %1659 = vmatprep.subr.bf16.mxu0 0
    %1660 = vmatpush1.bf16.msra.mxu0 %v1585
    %1661 = vmatprep.subr.bf16.mxu0 0
    %1662 = vmatpush1.bf16.msra.mxu0 %v1586
    %1663 = vmatprep.subr.bf16.mxu0 0
    %1664 = vmatpush1.bf16.msra.mxu0 %v1587
    %1665 = vmatprep.subr.bf16.mxu0 0
    %1666 = vmatpush1.bf16.msra.mxu0 %v1588
    %1667 = vmatprep.subr.bf16.mxu0 0
    %1668 = vmatpush1.bf16.msra.mxu0 %v1589
    %1669 = vmatprep.subr.bf16.mxu0 0
    %1670 = vmatpush1.bf16.msra.mxu0 %v1590
    %1671 = vmatprep.subr.bf16.mxu0 0
    %1672 = vmatpush1.bf16.msra.mxu0 0
    %1673 = vmatprep.subr.bf16.mxu0 0
    %1674 = vmatpush1.bf16.msra.mxu0 0
    %1675 = vmatprep.subr.bf16.mxu0 0
    %1676 = vmatpush1.bf16.msra.mxu0 0
    %1677 = vmatprep.subr.bf16.mxu0 0
    %1678 = vmatpush1.bf16.msra.mxu0 0
    %1679 = vmatprep.subr.bf16.mxu0 0
    %1680 = vmatpush1.bf16.msra.mxu0 0
    %1681 = vmatprep.subr.bf16.mxu0 0
    %1682 = vmatpush1.bf16.msra.mxu0 0
    %1683 = vmatprep.subr.bf16.mxu0 0
    %1684 = vmatpush1.bf16.msra.mxu0 0
    %1685 = vmatprep.subr.bf16.mxu0 0
    %1686 = vmatpush1.bf16.msra.mxu0 0
    %1687 = vmatprep.mubr.bf16.mxu0 0
    %1688 = vmatmul.mubr.bf16.gmra.mrb[0].mxu0 %v1415
    %v1689 = vpop.f32.mrb[0].mxu0
    %v1690 = vadd.f32 %v1650, %v1689
    %v1691 = vpop.f32.mrb[0].mxu0
    %v1692 = vpop.f32.mrb[0].mxu0
    %v1693 = vpop.f32.mrb[0].mxu0
    %1694 = vdwg.mxu0
    %1695 = vst [vmem:[#allocation10] sm:$0x3] %v1690
    // Predicated region
    $region46: #{tpu_custom_call.1} parent=1 // pred_check
      _
    $region47: #{tpu_custom_call.1} parent=1 // pred_check_branch
      %1697 = sbr.rel (0) target = $region49
    $region48: #{tpu_custom_call.1} parent=1 // pred_region
      %s1699 = ssub.s32 32, 32
      %1700 = vsyncadd [#allocation4], %s1699
      %s1702 = sshll.u32 [#allocation10], 4
      %s1703 = int_to_ptr.vmem [resolvable:$true] %s1702
      %1705 = dma.vmem_to_hbm [thread:$0]  %s1703, 32, %s7, [#allocation4]
    $region49: #{tpu_custom_call.1} parent=1 // pred_fallthru
      _
    // Predicated region
    $region50: #{tpu_custom_call.1} parent=1 // pred_check
      _
    $region51: #{tpu_custom_call.1} parent=1 // pred_check_branch
      %1707 = sbr.rel (0) target = $region53
    $region52: #{tpu_custom_call.1} parent=1 // pred_region
      %1708 = dma.done [#allocation4], 32
    $region53: #{tpu_custom_call.1} parent=1 // pred_fallthru
      _
    %1709 = vsyncpa [#allocation3], 1
    %1710 = vsyncpa [#allocation6], 1
    %1711 = vsyncpa [#allocation9], 1
    %1712 = vsyncpa [#allocation4], 1

</llo_original>
